<compile_context>
chip_gen: v7x
topology: tpu7x:2x2x1
jax: 0.10.0
libtpu: 0.0.40
codegen_flags: <defaults>
</compile_context>

<pallas_src>
import math
from functools import partial

import jax
import jax.numpy as jnp
from jax import lax
from jax.experimental import pallas as pl
from jax.experimental.pallas import tpu as pltpu


def _layer_norm(h, gamma, beta, eps=1e-6):
    mu = jnp.mean(h, axis=-1, keepdims=True)
    var = jnp.mean((h - mu) ** 2, axis=-1, keepdims=True)
    return (h - mu) * lax.rsqrt(var + eps) * gamma + beta


# In-kernel matmuls: explicit DEFAULT precision (1-pass bf16 MXU, f32 accumulate)
# so the kernel does not inherit 'highest' (multi-pass f32) from the host config.
_dot = partial(jnp.dot, preferred_element_type=jnp.float32,
               precision=lax.Precision.DEFAULT)


def qkv_layer_kernel(pooling,
                     mask_ref, x_ref, y_ref,
                     wqk_ref, wvfc_ref, bfc_ref, g1_ref, b1_ref,
                     w1_ref, bw1_ref, w2_ref, bw2_ref, g2_ref, b2_ref,
                     o_ref):
    x = x_ref[...]          # (Bt, n, d_in)   kv_data block
    mask = mask_ref[...]    # (Bt, n)         1.0 = keep, 0.0 = masked
    yq = y_ref[...]         # (Bt, d_q)       q_data (query seq length is 1, squeezed in wrapper)

    # --- sequence pooling of kv (residual branch) --------------------------
    if pooling == "mean":
        residual = jnp.mean(x, axis=1)                 # (Bt, d_in)
    else:
        residual = jnp.max(x, axis=1)                  # (Bt, d_in)

    # --- folded q/k projection (1/sqrt(dk) already folded into wqk) --------
    kq = _dot(yq, wqk_ref[...])                        # (Bt, d_in), MXU

    # --- attention scores on the VPU (q-seq-len == 1; M=1 MXU matmuls would
    #     waste the systolic array) + masking + softmax ----------------------
    scores = jnp.sum(kq[:, None, :] * x, axis=-1)      # (Bt, n), lane reduce
    scores = scores + (1.0 - mask) * (-10000.0)

    m = jnp.max(scores, axis=-1, keepdims=True)
    e = jnp.exp(scores - m)
    denom = jnp.sum(e, axis=-1, keepdims=True)
    probs = e * pl.reciprocal(denom, approx=True)      # (Bt, n), EUP reciprocal
    # TODO(synk): attention-prob / FFN dropout are identity in eval mode.

    # --- att -> fc_v folded: h = (probs @ x) @ (Wv Wfc) ---------------------
    px = jnp.sum(probs[:, :, None] * x, axis=1)        # (Bt, d_in), sublane reduce
    h = _dot(px, wvfc_ref[...]) + bfc_ref[...] + residual
    att_out = _layer_norm(h, g1_ref[...], b1_ref[...])

    # --- PositionwiseFeedForward --------------------------------------------
    f = jnp.maximum(_dot(att_out, w1_ref[...]) + bw1_ref[...], 0.0)
    f = _dot(f, w2_ref[...]) + bw2_ref[...] + att_out
    o_ref[...] = _layer_norm(f, g2_ref[...], b2_ref[...])


def qkv_layer_forward(mask, kv_data, q_data, params, pooling="mean",
                      b_tile=None, vmem_limit_bytes=48 * 1024 * 1024):
    B, n, d_in = kv_data.shape
    assert q_data.shape[1] == 1, "query sequence length must be 1"
    d_q = q_data.shape[-1]
    dk = params["wq"].shape[1]
    d_hid = params["w1"].shape[1]
    d_out = params["w2"].shape[1]

    # --- wrapper-side weight folding (exact f32, done once) -----------------
    fold = partial(jnp.dot, preferred_element_type=jnp.float32,
                   precision=lax.Precision.HIGHEST)
    wqk = fold(params["wq"], params["wk"].T) * (1.0 / math.sqrt(dk))   # (d_q, d_in)
    wvfc = fold(params["wv"], params["wfc"])                            # (d_in, d_in)

    # --- batch tiling: pad B to a multiple of the 8-aligned tile -------------
    B_pad = -(-B // 8) * 8
    if b_tile is None:
        if B_pad >= 16:
            # Fill up to 256 MXU rows but keep >= 2 grid steps (v7x has 2 TCs).
            # On single-TC v5e/v6e callers may pass b_tile=B to collapse the grid.
            b_tile = min(256, max(8, (B_pad // 2) // 8 * 8))
        else:
            b_tile = B_pad
    else:
        b_tile = min(B_pad, max(8, (b_tile // 8) * 8))
    B_pad = -(-B_pad // b_tile) * b_tile

    if B_pad != B:
        pad = B_pad - B
        mask = jnp.pad(mask, ((0, pad), (0, 0)))
        kv_data = jnp.pad(kv_data, ((0, pad), (0, 0), (0, 0)))
        q_data = jnp.pad(q_data, ((0, pad), (0, 0), (0, 0)))

    # q has sequence length 1: present it to the kernel as a 2-D lane-dense slab.
    yq2 = q_data.reshape(B_pad, d_q)

    weights = (wqk, wvfc,
               params["bfc"], params["g1"], params["b1"],
               params["w1"], params["bw1"], params["w2"], params["bw2"],
               params["g2"], params["b2"])

    def const_spec(a):
        nd = a.ndim
        return pl.BlockSpec(tuple(a.shape), lambda b, nd=nd: (0,) * nd)

    in_specs = ([pl.BlockSpec((b_tile, n), lambda b: (b, 0)),
                 pl.BlockSpec((b_tile, n, d_in), lambda b: (b, 0, 0)),
                 pl.BlockSpec((b_tile, d_q), lambda b: (b, 0))]
                + [const_spec(w) for w in weights])
    out_spec = pl.BlockSpec((b_tile, d_out), lambda b: (b, 0))

    flops = 2 * B_pad * (d_q * d_in          # yq @ wqk
                         + 2 * n * d_in      # scores + probs@x (VPU)
                         + d_in * d_in       # px @ wvfc
                         + 2 * d_out * d_hid)  # FFN
    bytes_accessed = 4 * (mask.size + kv_data.size + yq2.size
                          + sum(int(w.size) for w in weights) + B_pad * d_out)
    cost = pl.CostEstimate(flops=int(flops),
                           transcendentals=int(B_pad * (n + 4)),
                           bytes_accessed=int(bytes_accessed))

    out = pl.pallas_call(
        partial(qkv_layer_kernel, pooling),
        out_shape=jax.ShapeDtypeStruct((B_pad, d_out), jnp.float32),
        grid=(B_pad // b_tile,),
        in_specs=in_specs,
        out_specs=out_spec,
        compiler_params=pltpu.CompilerParams(
            dimension_semantics=("parallel",),       # shard batch blocks across TCs (v7x)
            vmem_limit_bytes=vmem_limit_bytes),      # 48 MiB: headroom under v7x's 64 MiB/TC
        cost_estimate=cost,
    )(mask, kv_data, yq2, *weights)
    return out[:B]


def qkv_layer_reference(mask, x, y, p, pooling="mean"):
    """Pure-JAX reference mirroring the PyTorch forward (eval mode), full f32."""
    if pooling == "mean":
        residual = jnp.mean(x, axis=1)
    else:
        residual = jnp.max(x, axis=1)
    hp = lax.Precision.HIGHEST
    q = jnp.einsum("bmd,dk->bmk", y, p["wq"], precision=hp)
    k = jnp.einsum("bnd,dk->bnk", x, p["wk"], precision=hp)
    v = jnp.einsum("bnd,dk->bnk", x, p["wv"], precision=hp)
    scale = 1.0 / math.sqrt(p["wq"].shape[1])
    scores = (jnp.einsum("bmk,bnk->bmn", q, k, precision=hp) * scale
              + ((1.0 - mask) * -10000.0)[:, None, :])
    probs = jax.nn.softmax(scores, axis=-1)
    att = jnp.einsum("bmn,bnd->bmd", probs, v, precision=hp)[:, 0, :]
    h = jnp.dot(att, p["wfc"], precision=hp) + p["bfc"] + residual
    att_out = _layer_norm(h, p["g1"], p["b1"])
    f = jnp.maximum(jnp.dot(att_out, p["w1"], precision=hp) + p["bw1"], 0.0)
    f = jnp.dot(f, p["w2"], precision=hp) + p["bw2"] + att_out
    return _layer_norm(f, p["g2"], p["b2"])


def init_params(key, q_input_dim, kv_input_dim, qkv_out_dim, qk_dim=512):
    ks = jax.random.split(key, 8)
    s = 0.05
    d_hid = qkv_out_dim * 2
    return {
        # Previewing_aware_Attention
        "wq":  s * jax.random.normal(ks[0], (q_input_dim, qk_dim), jnp.float32),
        "wk":  s * jax.random.normal(ks[1], (kv_input_dim, qk_dim), jnp.float32),
        "wv":  s * jax.random.normal(ks[2], (kv_input_dim, qkv_out_dim), jnp.float32),
        "wfc": s * jax.random.normal(ks[3], (qkv_out_dim, kv_input_dim), jnp.float32),
        "bfc": jnp.zeros((1, kv_input_dim), jnp.float32),
        "g1":  jnp.ones((1, qkv_out_dim), jnp.float32),
        "b1":  jnp.zeros((1, qkv_out_dim), jnp.float32),
        # PositionwiseFeedForward
        "w1":  s * jax.random.normal(ks[4], (qkv_out_dim, d_hid), jnp.float32),
        "bw1": 0.01 * jax.random.normal(ks[5], (1, d_hid), jnp.float32),
        "w2":  s * jax.random.normal(ks[6], (d_hid, qkv_out_dim), jnp.float32),
        "bw2": 0.01 * jax.random.normal(ks[7], (1, qkv_out_dim), jnp.float32),
        "g2":  jnp.ones((1, qkv_out_dim), jnp.float32),
        "b2":  jnp.zeros((1, qkv_out_dim), jnp.float32),
    }


if __name__ == "__main__":
    # Reference (and the one-time wrapper weight folds) run at full f32 precision;
    # the kernel pins lax.Precision.DEFAULT explicitly on its matmuls.
    jax.config.update("jax_default_matmul_precision", "highest")

    # Small but lane-dense shapes: feature dims are multiples of 128 so every
    # matmul N and the output store are full-width. The module requires
    # kv_input_dim == qkv_out_dim and query sequence length == 1.
    B, n = 16, 16
    q_input_dim = 128
    kv_input_dim = qkv_out_dim = 128

    key = jax.random.PRNGKey(0)
    k_x, k_y, k_p = jax.random.split(key, 3)

    params = init_params(k_p, q_input_dim, kv_input_dim, qkv_out_dim)
    kv_data = jax.random.normal(k_x, (B, n, kv_input_dim), jnp.float32)
    q_data = jax.random.normal(k_y, (B, 1, q_input_dim), jnp.float32)
    # Per-batch valid lengths in [1, n]; positions >= len are masked out.
    lens = (jnp.arange(B) % n) + 1
    mask = (jnp.arange(n)[None, :] < lens[:, None]).astype(jnp.float32)

    # Tolerance: the kernel uses single-pass bf16 MXU matmuls (DEFAULT precision),
    # folded-weight reassociation and the EUP approximate reciprocal, while the
    # reference is full f32 — expect ~1e-2-level worst-case differences on O(1),
    # LayerNorm-amplified outputs.
    for pooling in ("mean", "max"):
        out = qkv_layer_forward(mask, kv_data, q_data, params, pooling=pooling)
        out = jax.block_until_ready(out)
        ref = qkv_layer_reference(mask, kv_data, q_data, params, pooling=pooling)
        assert out.shape == (B, qkv_out_dim)
        assert jnp.allclose(out, ref, atol=3e-2, rtol=3e-2), (
            f"{pooling}: max abs err {jnp.max(jnp.abs(out - ref))}")

    print("KERNEL_OK")
</pallas_src>

<mosaic_0001>
module attributes {stable_mosaic.version = 11 : i64} {
  func.func @qkv_layer_kernel(%arg0: i32, %arg1: memref<8x16xf32, #tpu.memory_space<vmem>>, %arg2: memref<8x16x128xf32, #tpu.memory_space<vmem>>, %arg3: memref<8x128xf32, #tpu.memory_space<vmem>>, %arg4: memref<128x128xf32, #tpu.memory_space<vmem>>, %arg5: memref<128x128xf32, #tpu.memory_space<vmem>>, %arg6: memref<1x128xf32, #tpu.memory_space<vmem>>, %arg7: memref<1x128xf32, #tpu.memory_space<vmem>>, %arg8: memref<1x128xf32, #tpu.memory_space<vmem>>, %arg9: memref<128x256xf32, #tpu.memory_space<vmem>>, %arg10: memref<1x256xf32, #tpu.memory_space<vmem>>, %arg11: memref<256x128xf32, #tpu.memory_space<vmem>>, %arg12: memref<1x128xf32, #tpu.memory_space<vmem>>, %arg13: memref<1x128xf32, #tpu.memory_space<vmem>>, %arg14: memref<1x128xf32, #tpu.memory_space<vmem>>, %arg15: memref<8x128xf32, #tpu.memory_space<vmem>>) attributes {dimension_semantics = [#tpu.dimension_semantics<parallel>], iteration_bounds = array<i64: 2>, scalar_prefetch = 0 : i64, scratch_operands = 0 : i64, tpu.core_type = #tpu.core_type<tc>, window_params = [{transform_indices = @transform_0, window_bounds = array<i64: 8, 16>}, {transform_indices = @transform_1, window_bounds = array<i64: 8, 16, 128>}, {transform_indices = @transform_2, window_bounds = array<i64: 8, 128>}, {pipeline_mode = #tpu.pipeline_mode<synchronous>, transform_indices = @transform_3, window_bounds = array<i64: 128, 128>}, {pipeline_mode = #tpu.pipeline_mode<synchronous>, transform_indices = @transform_4, window_bounds = array<i64: 128, 128>}, {pipeline_mode = #tpu.pipeline_mode<synchronous>, transform_indices = @transform_5, window_bounds = array<i64: 1, 128>}, {pipeline_mode = #tpu.pipeline_mode<synchronous>, transform_indices = @transform_6, window_bounds = array<i64: 1, 128>}, {pipeline_mode = #tpu.pipeline_mode<synchronous>, transform_indices = @transform_7, window_bounds = array<i64: 1, 128>}, {pipeline_mode = #tpu.pipeline_mode<synchronous>, transform_indices = @transform_8, window_bounds = array<i64: 128, 256>}, {pipeline_mode = #tpu.pipeline_mode<synchronous>, transform_indices = @transform_9, window_bounds = array<i64: 1, 256>}, {pipeline_mode = #tpu.pipeline_mode<synchronous>, transform_indices = @transform_10, window_bounds = array<i64: 256, 128>}, {pipeline_mode = #tpu.pipeline_mode<synchronous>, transform_indices = @transform_11, window_bounds = array<i64: 1, 128>}, {pipeline_mode = #tpu.pipeline_mode<synchronous>, transform_indices = @transform_12, window_bounds = array<i64: 1, 128>}, {pipeline_mode = #tpu.pipeline_mode<synchronous>, transform_indices = @transform_13, window_bounds = array<i64: 1, 128>}, {transform_indices = @transform_14, window_bounds = array<i64: 8, 128>}]} {
    %c0 = arith.constant 0 : index
    %c0_0 = arith.constant 0 : index
    %c0_1 = arith.constant 0 : index
    %0 = vector.load %arg2[%c0, %c0_0, %c0_1] : memref<8x16x128xf32, #tpu.memory_space<vmem>>, vector<8x16x128xf32>
    %c0_2 = arith.constant 0 : index
    %c0_3 = arith.constant 0 : index
    %1 = vector.load %arg1[%c0_2, %c0_3] : memref<8x16xf32, #tpu.memory_space<vmem>>, vector<8x16xf32>
    %c0_4 = arith.constant 0 : index
    %c0_5 = arith.constant 0 : index
    %2 = vector.load %arg3[%c0_4, %c0_5] : memref<8x128xf32, #tpu.memory_space<vmem>>, vector<8x128xf32>
    %cst = arith.constant dense<0.000000e+00> : vector<8x128xf32>
    %3 = vector.multi_reduction <add>, %0, %cst [1] : vector<8x16x128xf32> to vector<8x128xf32>
    %cst_6 = arith.constant 1.600000e+01 : f32
    %4 = vector.broadcast %cst_6 : f32 to vector<8x128xf32>
    %5 = arith.divf %3, %4 : vector<8x128xf32>
    %c0_7 = arith.constant 0 : index
    %c0_8 = arith.constant 0 : index
    %6 = vector.load %arg4[%c0_7, %c0_8] : memref<128x128xf32, #tpu.memory_space<vmem>>, vector<128x128xf32>
    %cst_9 = arith.constant dense<0.000000e+00> : vector<8x128xf32>
    %7 = tpu.matmul %2, %6, %cst_9 {dimension_numbers = #tpu.dot_dimension_numbers<[1], [0], [0], [1], [0, 0, 1, 1], [], []>} : vector<8x128xf32>, vector<128x128xf32>, vector<8x128xf32> -> vector<8x128xf32>
    %8 = vector.shape_cast %7 : vector<8x128xf32> to vector<8x1x128xf32>
    %9 = vector.broadcast %8 : vector<8x1x128xf32> to vector<8x16x128xf32>
    %10 = arith.mulf %9, %0 : vector<8x16x128xf32>
    %cst_10 = arith.constant dense<0.000000e+00> : vector<8x16xf32>
    %11 = vector.multi_reduction <add>, %10, %cst_10 [2] : vector<8x16x128xf32> to vector<8x16xf32>
    %cst_11 = arith.constant 1.000000e+00 : f32
    %12 = vector.broadcast %cst_11 : f32 to vector<8x16xf32>
    %13 = arith.subf %12, %1 : vector<8x16xf32>
    %cst_12 = arith.constant -1.000000e+04 : f32
    %14 = vector.broadcast %cst_12 : f32 to vector<8x16xf32>
    %15 = arith.mulf %13, %14 : vector<8x16xf32>
    %16 = arith.addf %11, %15 : vector<8x16xf32>
    %cst_13 = arith.constant dense<0xFF800000> : vector<8xf32>
    %17 = vector.multi_reduction <maximumf>, %16, %cst_13 [1] : vector<8x16xf32> to vector<8xf32>
    %18 = vector.shape_cast %17 : vector<8xf32> to vector<8x1xf32>
    %19 = vector.broadcast %18 : vector<8x1xf32> to vector<8x16xf32>
    %20 = arith.subf %16, %19 : vector<8x16xf32>
    %21 = math.exp %20 : vector<8x16xf32>
    %cst_14 = arith.constant dense<0.000000e+00> : vector<8xf32>
    %22 = vector.multi_reduction <add>, %21, %cst_14 [1] : vector<8x16xf32> to vector<8xf32>
    %23 = vector.shape_cast %22 : vector<8xf32> to vector<8x1xf32>
    %24 = tpu.reciprocal %23 {approx = true} : vector<8x1xf32> -> vector<8x1xf32>
    %25 = vector.broadcast %24 : vector<8x1xf32> to vector<8x16xf32>
    %26 = arith.mulf %21, %25 : vector<8x16xf32>
    %27 = vector.shape_cast %26 : vector<8x16xf32> to vector<8x16x1xf32>
    %28 = vector.broadcast %27 : vector<8x16x1xf32> to vector<8x16x128xf32>
    %29 = arith.mulf %28, %0 : vector<8x16x128xf32>
    %cst_15 = arith.constant dense<0.000000e+00> : vector<8x128xf32>
    %30 = vector.multi_reduction <add>, %29, %cst_15 [1] : vector<8x16x128xf32> to vector<8x128xf32>
    %c0_16 = arith.constant 0 : index
    %c0_17 = arith.constant 0 : index
    %31 = vector.load %arg5[%c0_16, %c0_17] : memref<128x128xf32, #tpu.memory_space<vmem>>, vector<128x128xf32>
    %cst_18 = arith.constant dense<0.000000e+00> : vector<8x128xf32>
    %32 = tpu.matmul %30, %31, %cst_18 {dimension_numbers = #tpu.dot_dimension_numbers<[1], [0], [0], [1], [0, 0, 1, 1], [], []>} : vector<8x128xf32>, vector<128x128xf32>, vector<8x128xf32> -> vector<8x128xf32>
    %c0_19 = arith.constant 0 : index
    %c0_20 = arith.constant 0 : index
    %33 = vector.load %arg6[%c0_19, %c0_20] : memref<1x128xf32, #tpu.memory_space<vmem>>, vector<1x128xf32>
    %34 = vector.broadcast %33 : vector<1x128xf32> to vector<8x128xf32>
    %35 = arith.addf %32, %34 : vector<8x128xf32>
    %36 = arith.addf %35, %5 : vector<8x128xf32>
    %c0_21 = arith.constant 0 : index
    %c0_22 = arith.constant 0 : index
    %37 = vector.load %arg7[%c0_21, %c0_22] : memref<1x128xf32, #tpu.memory_space<vmem>>, vector<1x128xf32>
    %c0_23 = arith.constant 0 : index
    %c0_24 = arith.constant 0 : index
    %38 = vector.load %arg8[%c0_23, %c0_24] : memref<1x128xf32, #tpu.memory_space<vmem>>, vector<1x128xf32>
    %cst_25 = arith.constant dense<0.000000e+00> : vector<8xf32>
    %39 = vector.multi_reduction <add>, %36, %cst_25 [1] : vector<8x128xf32> to vector<8xf32>
    %40 = vector.shape_cast %39 : vector<8xf32> to vector<8x1xf32>
    %cst_26 = arith.constant 1.280000e+02 : f32
    %41 = vector.broadcast %cst_26 : f32 to vector<8x1xf32>
    %42 = arith.divf %40, %41 : vector<8x1xf32>
    %43 = vector.broadcast %42 : vector<8x1xf32> to vector<8x128xf32>
    %44 = arith.subf %36, %43 : vector<8x128xf32>
    %45 = arith.mulf %44, %44 : vector<8x128xf32>
    %cst_27 = arith.constant dense<0.000000e+00> : vector<8xf32>
    %46 = vector.multi_reduction <add>, %45, %cst_27 [1] : vector<8x128xf32> to vector<8xf32>
    %47 = vector.shape_cast %46 : vector<8xf32> to vector<8x1xf32>
    %cst_28 = arith.constant 1.280000e+02 : f32
    %48 = vector.broadcast %cst_28 : f32 to vector<8x1xf32>
    %49 = arith.divf %47, %48 : vector<8x1xf32>
    %50 = vector.broadcast %42 : vector<8x1xf32> to vector<8x128xf32>
    %51 = arith.subf %36, %50 : vector<8x128xf32>
    %cst_29 = arith.constant 9.99999997E-7 : f32
    %52 = vector.broadcast %cst_29 : f32 to vector<8x1xf32>
    %53 = arith.addf %49, %52 : vector<8x1xf32>
    %54 = math.rsqrt %53 : vector<8x1xf32>
    %55 = vector.broadcast %54 : vector<8x1xf32> to vector<8x128xf32>
    %56 = arith.mulf %51, %55 : vector<8x128xf32>
    %57 = vector.broadcast %37 : vector<1x128xf32> to vector<8x128xf32>
    %58 = arith.mulf %56, %57 : vector<8x128xf32>
    %59 = vector.broadcast %38 : vector<1x128xf32> to vector<8x128xf32>
    %60 = arith.addf %58, %59 : vector<8x128xf32>
    %c0_30 = arith.constant 0 : index
    %c0_31 = arith.constant 0 : index
    %61 = vector.load %arg9[%c0_30, %c0_31] : memref<128x256xf32, #tpu.memory_space<vmem>>, vector<128x256xf32>
    %cst_32 = arith.constant dense<0.000000e+00> : vector<8x256xf32>
    %62 = tpu.matmul %60, %61, %cst_32 {dimension_numbers = #tpu.dot_dimension_numbers<[1], [0], [0], [1], [0, 0, 1, 1], [], []>} : vector<8x128xf32>, vector<128x256xf32>, vector<8x256xf32> -> vector<8x256xf32>
    %c0_33 = arith.constant 0 : index
    %c0_34 = arith.constant 0 : index
    %63 = vector.load %arg10[%c0_33, %c0_34] : memref<1x256xf32, #tpu.memory_space<vmem>>, vector<1x256xf32>
    %64 = vector.broadcast %63 : vector<1x256xf32> to vector<8x256xf32>
    %65 = arith.addf %62, %64 : vector<8x256xf32>
    %cst_35 = arith.constant 0.000000e+00 : f32
    %66 = vector.broadcast %cst_35 : f32 to vector<8x256xf32>
    %67 = arith.maximumf %65, %66 : vector<8x256xf32>
    %c0_36 = arith.constant 0 : index
    %c0_37 = arith.constant 0 : index
    %68 = vector.load %arg11[%c0_36, %c0_37] : memref<256x128xf32, #tpu.memory_space<vmem>>, vector<256x128xf32>
    %cst_38 = arith.constant dense<0.000000e+00> : vector<8x128xf32>
    %69 = tpu.matmul %67, %68, %cst_38 {dimension_numbers = #tpu.dot_dimension_numbers<[1], [0], [0], [1], [0, 0, 1, 1], [], []>} : vector<8x256xf32>, vector<256x128xf32>, vector<8x128xf32> -> vector<8x128xf32>
    %c0_39 = arith.constant 0 : index
    %c0_40 = arith.constant 0 : index
    %70 = vector.load %arg12[%c0_39, %c0_40] : memref<1x128xf32, #tpu.memory_space<vmem>>, vector<1x128xf32>
    %71 = vector.broadcast %70 : vector<1x128xf32> to vector<8x128xf32>
    %72 = arith.addf %69, %71 : vector<8x128xf32>
    %73 = arith.addf %72, %60 : vector<8x128xf32>
    %c0_41 = arith.constant 0 : index
    %c0_42 = arith.constant 0 : index
    %74 = vector.load %arg13[%c0_41, %c0_42] : memref<1x128xf32, #tpu.memory_space<vmem>>, vector<1x128xf32>
    %c0_43 = arith.constant 0 : index
    %c0_44 = arith.constant 0 : index
    %75 = vector.load %arg14[%c0_43, %c0_44] : memref<1x128xf32, #tpu.memory_space<vmem>>, vector<1x128xf32>
    %cst_45 = arith.constant dense<0.000000e+00> : vector<8xf32>
    %76 = vector.multi_reduction <add>, %73, %cst_45 [1] : vector<8x128xf32> to vector<8xf32>
    %77 = vector.shape_cast %76 : vector<8xf32> to vector<8x1xf32>
    %cst_46 = arith.constant 1.280000e+02 : f32
    %78 = vector.broadcast %cst_46 : f32 to vector<8x1xf32>
    %79 = arith.divf %77, %78 : vector<8x1xf32>
    %80 = vector.broadcast %79 : vector<8x1xf32> to vector<8x128xf32>
    %81 = arith.subf %73, %80 : vector<8x128xf32>
    %82 = arith.mulf %81, %81 : vector<8x128xf32>
    %cst_47 = arith.constant dense<0.000000e+00> : vector<8xf32>
    %83 = vector.multi_reduction <add>, %82, %cst_47 [1] : vector<8x128xf32> to vector<8xf32>
    %84 = vector.shape_cast %83 : vector<8xf32> to vector<8x1xf32>
    %cst_48 = arith.constant 1.280000e+02 : f32
    %85 = vector.broadcast %cst_48 : f32 to vector<8x1xf32>
    %86 = arith.divf %84, %85 : vector<8x1xf32>
    %87 = vector.broadcast %79 : vector<8x1xf32> to vector<8x128xf32>
    %88 = arith.subf %73, %87 : vector<8x128xf32>
    %cst_49 = arith.constant 9.99999997E-7 : f32
    %89 = vector.broadcast %cst_49 : f32 to vector<8x1xf32>
    %90 = arith.addf %86, %89 : vector<8x1xf32>
    %91 = math.rsqrt %90 : vector<8x1xf32>
    %92 = vector.broadcast %91 : vector<8x1xf32> to vector<8x128xf32>
    %93 = arith.mulf %88, %92 : vector<8x128xf32>
    %94 = vector.broadcast %74 : vector<1x128xf32> to vector<8x128xf32>
    %95 = arith.mulf %93, %94 : vector<8x128xf32>
    %96 = vector.broadcast %75 : vector<1x128xf32> to vector<8x128xf32>
    %97 = arith.addf %95, %96 : vector<8x128xf32>
    %c0_50 = arith.constant 0 : index
    %c0_51 = arith.constant 0 : index
    %98 = vector.load %arg15[%c0_50, %c0_51] : memref<8x128xf32, #tpu.memory_space<vmem>>, vector<8x128xf32>
    tpu.vector_store %arg15[%c0_50, %c0_51], %97 {strides = array<i32>} : memref<8x128xf32, #tpu.memory_space<vmem>>, vector<8x128xf32>,
    return
  }
  func.func @transform_0(%arg0: i32) -> (i32, i32) {
    %c0_i32 = arith.constant 0 : i32
    %c0_i32_0 = arith.constant 0 : i32
    return %arg0, %c0_i32 : i32, i32
  }
  func.func @transform_1(%arg0: i32) -> (i32, i32, i32) {
    %c0_i32 = arith.constant 0 : i32
    %c0_i32_0 = arith.constant 0 : i32
    %c0_i32_1 = arith.constant 0 : i32
    return %arg0, %c0_i32, %c0_i32_0 : i32, i32, i32
  }
  func.func @transform_2(%arg0: i32) -> (i32, i32) {
    %c0_i32 = arith.constant 0 : i32
    %c0_i32_0 = arith.constant 0 : i32
    return %arg0, %c0_i32 : i32, i32
  }
  func.func @transform_3(%arg0: i32) -> (i32, i32) {
    %c0_i32 = arith.constant 0 : i32
    %c0_i32_0 = arith.constant 0 : i32
    %c0_i32_1 = arith.constant 0 : i32
    return %c0_i32, %c0_i32_0 : i32, i32
  }
  func.func @transform_4(%arg0: i32) -> (i32, i32) {
    %c0_i32 = arith.constant 0 : i32
    %c0_i32_0 = arith.constant 0 : i32
    %c0_i32_1 = arith.constant 0 : i32
    return %c0_i32, %c0_i32_0 : i32, i32
  }
  func.func @transform_5(%arg0: i32) -> (i32, i32) {
    %c0_i32 = arith.constant 0 : i32
    %c0_i32_0 = arith.constant 0 : i32
    %c0_i32_1 = arith.constant 0 : i32
    return %c0_i32, %c0_i32_0 : i32, i32
  }
  func.func @transform_6(%arg0: i32) -> (i32, i32) {
    %c0_i32 = arith.constant 0 : i32
    %c0_i32_0 = arith.constant 0 : i32
    %c0_i32_1 = arith.constant 0 : i32
    return %c0_i32, %c0_i32_0 : i32, i32
  }
  func.func @transform_7(%arg0: i32) -> (i32, i32) {
    %c0_i32 = arith.constant 0 : i32
    %c0_i32_0 = arith.constant 0 : i32
    %c0_i32_1 = arith.constant 0 : i32
    return %c0_i32, %c0_i32_0 : i32, i32
  }
  func.func @transform_8(%arg0: i32) -> (i32, i32) {
    %c0_i32 = arith.constant 0 : i32
    %c0_i32_0 = arith.constant 0 : i32
    %c0_i32_1 = arith.constant 0 : i32
    return %c0_i32, %c0_i32_0 : i32, i32
  }
  func.func @transform_9(%arg0: i32) -> (i32, i32) {
    %c0_i32 = arith.constant 0 : i32
    %c0_i32_0 = arith.constant 0 : i32
    %c0_i32_1 = arith.constant 0 : i32
    return %c0_i32, %c0_i32_0 : i32, i32
  }
  func.func @transform_10(%arg0: i32) -> (i32, i32) {
    %c0_i32 = arith.constant 0 : i32
    %c0_i32_0 = arith.constant 0 : i32
    %c0_i32_1 = arith.constant 0 : i32
    return %c0_i32, %c0_i32_0 : i32, i32
  }
  func.func @transform_11(%arg0: i32) -> (i32, i32) {
    %c0_i32 = arith.constant 0 : i32
    %c0_i32_0 = arith.constant 0 : i32
    %c0_i32_1 = arith.constant 0 : i32
    return %c0_i32, %c0_i32_0 : i32, i32
  }
  func.func @transform_12(%arg0: i32) -> (i32, i32) {
    %c0_i32 = arith.constant 0 : i32
    %c0_i32_0 = arith.constant 0 : i32
    %c0_i32_1 = arith.constant 0 : i32
    return %c0_i32, %c0_i32_0 : i32, i32
  }
  func.func @transform_13(%arg0: i32) -> (i32, i32) {
    %c0_i32 = arith.constant 0 : i32
    %c0_i32_0 = arith.constant 0 : i32
    %c0_i32_1 = arith.constant 0 : i32
    return %c0_i32, %c0_i32_0 : i32, i32
  }
  func.func @transform_14(%arg0: i32) -> (i32, i32) {
    %c0_i32 = arith.constant 0 : i32
    %c0_i32_0 = arith.constant 0 : i32
    return %arg0, %c0_i32 : i32, i32
  }
}

</mosaic_0001>

<llo_original>
// kernel: tpu_custom_call.1
$region0: #{tpu_custom_call.1}
  #allocation0 [shape = 'u32[]', space=smem, size = 0x4, offset = 0x4, fixed_abs, tag = 'smem constant byte address 0x4 - core index']
  #allocation1 [shape = 'u32[144,128]{1,0:T(1,128)}', space=vmem, size = 0x12000, scoped, tag = 'internal scratch']
  %s0 = inlined_call_operand.hbm [shape: f32[16,16], index: 0, kind: input, shape index: {}]
  %s1 = inlined_call_operand.hbm [shape: f32[16,16,128], index: 1, kind: input, shape index: {}]
  %s2 = inlined_call_operand.hbm [shape: f32[16,128], index: 2, kind: input, shape index: {}]
  %s3 = inlined_call_operand.hbm [shape: f32[128,128], index: 3, kind: input, shape index: {}]
  %s4 = inlined_call_operand.hbm [shape: f32[128,128], index: 4, kind: input, shape index: {}]
  %s5 = inlined_call_operand.vmem [shape: f32[1,128], index: 5, kind: input, shape index: {}]
  %s6 = inlined_call_operand.vmem [shape: f32[1,128], index: 6, kind: input, shape index: {}]
  %s7 = inlined_call_operand.vmem [shape: f32[1,128], index: 7, kind: input, shape index: {}]
  %s8 = inlined_call_operand.hbm [shape: f32[128,256], index: 8, kind: input, shape index: {}]
  %s9 = inlined_call_operand.vmem [shape: f32[1,256], index: 9, kind: input, shape index: {}]
  %s10 = inlined_call_operand.hbm [shape: f32[256,128], index: 10, kind: input, shape index: {}]
  %s11 = inlined_call_operand.vmem [shape: f32[1,128], index: 11, kind: input, shape index: {}]
  %s12 = inlined_call_operand.vmem [shape: f32[1,128], index: 12, kind: input, shape index: {}]
  %s13 = inlined_call_operand.vmem [shape: f32[1,128], index: 13, kind: input, shape index: {}]
  %s14 = inlined_call_operand.hbm [shape: f32[16,128], index: 14, kind: output, shape index: {}]
  %s15 = sld [smem:[#allocation0]]
  $region117: #{tpu_custom_call.1} parent=0
    _
  %s17 = ssub.s32 1, %s15
  %s18 = scalar_select 0, %s17, %s15
  $region1: #{tpu_custom_call.1} parent=0
    #allocation2 [shape = 'u8[8192]{0}', space=vmem, size = 0x2000, scoped, tag = 'input window, operand 0']
    #allocation3 [shape = 's32[2]{0}', space=sflag, size = 0x8, scoped, tag = 'scoped memory for tpu_custom_call.1']
    #allocation4 [shape = 's32[2]{0}', space=sflag, size = 0x8, scoped, tag = 'scoped memory for tpu_custom_call.1']
    #allocation5 [shape = 'u8[131072]{0}', space=vmem, size = 0x20000, scoped, tag = 'input window, operand 1']
    #allocation6 [shape = 's32[2]{0}', space=sflag, size = 0x8, scoped, tag = 'scoped memory for tpu_custom_call.1']
    #allocation7 [shape = 'u8[8192]{0}', space=vmem, size = 0x2000, scoped, tag = 'input window, operand 2']
    #allocation8 [shape = 'u8[65536]{0}', space=vmem, size = 0x10000, scoped, tag = 'input window, operand 3, single buffered']
    #allocation9 [shape = 's32[1]{0}', space=sflag, size = 0x4, scoped, tag = 'scoped memory for tpu_custom_call.1']
    #allocation10 [shape = 'u8[65536]{0}', space=vmem, size = 0x10000, scoped, tag = 'input window, operand 4, single buffered']
    #allocation11 [shape = 'u8[131072]{0}', space=vmem, size = 0x20000, scoped, tag = 'input window, operand 8, single buffered']
    #allocation12 [shape = 's32[1]{0}', space=sflag, size = 0x4, scoped, tag = 'scoped memory for tpu_custom_call.1']
    #allocation13 [shape = 'u8[131072]{0}', space=vmem, size = 0x20000, scoped, tag = 'input window, operand 10, single buffered']
    #allocation14 [shape = 'u8[8192]{0}', space=vmem, size = 0x2000, scoped, tag = 'output window, operand 0']
    %19 = vsyncpa [#allocation3], 0
    %s20 = scalar_lea.sflag [#allocation3], 1
    %21 = vsyncpa %s20, 0
    %22 = vsyncpa [#allocation6], 0
    %s23 = scalar_lea.sflag [#allocation6], 1
    %24 = vsyncpa %s23, 0
    %25 = vsyncpa [#allocation9], 0
    %26 = vsyncpa [#allocation12], 0
    %27 = vsyncpa [#allocation4], 0
    %s28 = scalar_lea.sflag [#allocation4], 1
    %29 = vsyncpa %s28, 0
    loop: start=0, step=1, limit=4
    $region2: #{tpu_custom_call.1} parent=1 // loop_pre_header
      _
    $region3: #{tpu_custom_call.1} parent=1 // loop_header
      %s31 = sphi 0, %s35
      %p32 = scmp.ge.s32.totalorder %s31, 4
      %s41 = sphi 0, %s43
      %s44 = sphi 0, %s41
      %s45 = sphi 0, %s44
      %s61 = sphi 0, %s45
      %s67 = sphi 0, %s69
      %s70 = sphi 0, %s67
      %s71 = sphi 0, %s70
      %s87 = sphi 0, %s71
      %s93 = sphi 0, %s95
      %s96 = sphi 0, %s93
      %s97 = sphi 0, %s96
      %s113 = sphi 0, %s97
      %s117 = sphi 0, %s117
      %s119 = sphi 0, %s117
      %s120 = sphi 0, %s119
      %s134 = sphi 0, %s120
      %s138 = sphi 0, %s138
      %s140 = sphi 0, %s138
      %s141 = sphi 0, %s140
      %s155 = sphi 0, %s141
      %s159 = sphi 0, %s159
      %s161 = sphi 0, %s159
      %s162 = sphi 0, %s161
      %s176 = sphi 0, %s162
      %s180 = sphi 0, %s180
      %s182 = sphi 0, %s180
      %s183 = sphi 0, %s182
      %s197 = sphi 0, %s183
      %s201 = sphi 0, %s201
      %s203 = sphi 0, %s201
      %s204 = sphi 0, %s203
      %s218 = sphi 0, %s204
      %s222 = sphi 0, %s222
      %s224 = sphi 0, %s222
      %s225 = sphi 0, %s224
      %s239 = sphi 0, %s225
      %s243 = sphi 0, %s243
      %s245 = sphi 0, %s243
      %s246 = sphi 0, %s245
      %s260 = sphi 0, %s246
      %s264 = sphi 0, %s264
      %s266 = sphi 0, %s264
      %s267 = sphi 0, %s266
      %s281 = sphi 0, %s267
      %s285 = sphi 0, %s285
      %s287 = sphi 0, %s285
      %s288 = sphi 0, %s287
      %s302 = sphi 0, %s288
      %s306 = sphi 0, %s306
      %s308 = sphi 0, %s306
      %s309 = sphi 0, %s308
      %s323 = sphi 0, %s309
      %s327 = sphi 0, %s327
      %s329 = sphi 0, %s327
      %s330 = sphi 0, %s329
      %s344 = sphi 0, %s330
      %s350 = sphi 0, %s352
      %s353 = sphi 0, %s350
      %s354 = sphi 0, %s353
      %s370 = sphi 0, %s354
    $region4: #{tpu_custom_call.1} parent=1 // loop_header_branch
      %34 = sbr.rel (%p32) target = $region8
    $region5: #{tpu_custom_call.1} parent=1 // loop_body
      %s36 = ssub.s32 %s31, 1
      %s37 = ssub.s32 %s31, 2
      %s38 = sadd.s32 %s31, 1
      %s39 = ssub.s32 %s31, %s38
      %p40 = scmp.eq.s32.totalorder %s39, 0
      %s42 = sadd.s32 %s41, 1
      %s43 = scalar_select %p40, %s41, %s42
      %p46 = pneg %p40
      %p47 = scmp.eq.s32.totalorder %s31, 1
      %p48 = por %p46, %p47
      %p49 = scmp.ne.s32.totalorder %s41, %s44
      %p50 = scmp.eq.s32.totalorder %s31, 0
      %p51 = por %p49, %p50
      %p52 = scmp.ne.s32.totalorder %s41, %s44
      %p53 = scmp.eq.s32.totalorder %s36, 1
      %p54 = por %p52, %p53
      %p55 = scmp.ne.s32.totalorder %s44, %s45
      %p56 = scmp.eq.s32.totalorder %s36, 0
      %p57 = por %p55, %p56
      %p58 = scmp.ne.s32.totalorder %s44, %s45
      %p59 = scmp.eq.s32.totalorder %s37, 1
      %p60 = por %p58, %p59
      %p62 = scmp.ne.s32.totalorder %s45, %s61
      %p63 = scmp.eq.s32.totalorder %s37, 0
      %p64 = por %p62, %p63
      %s65 = ssub.s32 %s31, %s38
      %p66 = scmp.eq.s32.totalorder %s65, 0
      %s68 = sadd.s32 %s67, 1
      %s69 = scalar_select %p66, %s67, %s68
      %p72 = pneg %p66
      %p73 = scmp.eq.s32.totalorder %s31, 1
      %p74 = por %p72, %p73
      %p75 = scmp.ne.s32.totalorder %s67, %s70
      %p76 = scmp.eq.s32.totalorder %s31, 0
      %p77 = por %p75, %p76
      %p78 = scmp.ne.s32.totalorder %s67, %s70
      %p79 = scmp.eq.s32.totalorder %s36, 1
      %p80 = por %p78, %p79
      %p81 = scmp.ne.s32.totalorder %s70, %s71
      %p82 = scmp.eq.s32.totalorder %s36, 0
      %p83 = por %p81, %p82
      %p84 = scmp.ne.s32.totalorder %s70, %s71
      %p85 = scmp.eq.s32.totalorder %s37, 1
      %p86 = por %p84, %p85
      %p88 = scmp.ne.s32.totalorder %s71, %s87
      %p89 = scmp.eq.s32.totalorder %s37, 0
      %p90 = por %p88, %p89
      %s91 = ssub.s32 %s31, %s38
      %p92 = scmp.eq.s32.totalorder %s91, 0
      %s94 = sadd.s32 %s93, 1
      %s95 = scalar_select %p92, %s93, %s94
      %p98 = pneg %p92
      %p99 = scmp.eq.s32.totalorder %s31, 1
      %p100 = por %p98, %p99
      %p101 = scmp.ne.s32.totalorder %s93, %s96
      %p102 = scmp.eq.s32.totalorder %s31, 0
      %p103 = por %p101, %p102
      %p104 = scmp.ne.s32.totalorder %s93, %s96
      %p105 = scmp.eq.s32.totalorder %s36, 1
      %p106 = por %p104, %p105
      %p107 = scmp.ne.s32.totalorder %s96, %s97
      %p108 = scmp.eq.s32.totalorder %s36, 0
      %p109 = por %p107, %p108
      %p110 = scmp.ne.s32.totalorder %s96, %s97
      %p111 = scmp.eq.s32.totalorder %s37, 1
      %p112 = por %p110, %p111
      %p114 = scmp.ne.s32.totalorder %s97, %s113
      %p115 = scmp.eq.s32.totalorder %s37, 0
      %p116 = por %p114, %p115
      %s118 = sadd.s32 %s117, 1
      %p121 = scmp.eq.s32.totalorder %s31, 1
      %p122 = scmp.ne.s32.totalorder %s117, %s119
      %p123 = scmp.eq.s32.totalorder %s31, 0
      %p124 = por %p122, %p123
      %p125 = scmp.ne.s32.totalorder %s117, %s119
      %p126 = scmp.eq.s32.totalorder %s36, 1
      %p127 = por %p125, %p126
      %p128 = scmp.ne.s32.totalorder %s119, %s120
      %p129 = scmp.eq.s32.totalorder %s36, 0
      %p130 = por %p128, %p129
      %p131 = scmp.ne.s32.totalorder %s119, %s120
      %p132 = scmp.eq.s32.totalorder %s37, 1
      %p133 = por %p131, %p132
      %p135 = scmp.ne.s32.totalorder %s120, %s134
      %p136 = scmp.eq.s32.totalorder %s37, 0
      %p137 = por %p135, %p136
      %s139 = sadd.s32 %s138, 1
      %p142 = scmp.eq.s32.totalorder %s31, 1
      %p143 = scmp.ne.s32.totalorder %s138, %s140
      %p144 = scmp.eq.s32.totalorder %s31, 0
      %p145 = por %p143, %p144
      %p146 = scmp.ne.s32.totalorder %s138, %s140
      %p147 = scmp.eq.s32.totalorder %s36, 1
      %p148 = por %p146, %p147
      %p149 = scmp.ne.s32.totalorder %s140, %s141
      %p150 = scmp.eq.s32.totalorder %s36, 0
      %p151 = por %p149, %p150
      %p152 = scmp.ne.s32.totalorder %s140, %s141
      %p153 = scmp.eq.s32.totalorder %s37, 1
      %p154 = por %p152, %p153
      %p156 = scmp.ne.s32.totalorder %s141, %s155
      %p157 = scmp.eq.s32.totalorder %s37, 0
      %p158 = por %p156, %p157
      %s160 = sadd.s32 %s159, 1
      %p163 = scmp.eq.s32.totalorder %s31, 1
      %p164 = scmp.ne.s32.totalorder %s159, %s161
      %p165 = scmp.eq.s32.totalorder %s31, 0
      %p166 = por %p164, %p165
      %p167 = scmp.ne.s32.totalorder %s159, %s161
      %p168 = scmp.eq.s32.totalorder %s36, 1
      %p169 = por %p167, %p168
      %p170 = scmp.ne.s32.totalorder %s161, %s162
      %p171 = scmp.eq.s32.totalorder %s36, 0
      %p172 = por %p170, %p171
      %p173 = scmp.ne.s32.totalorder %s161, %s162
      %p174 = scmp.eq.s32.totalorder %s37, 1
      %p175 = por %p173, %p174
      %p177 = scmp.ne.s32.totalorder %s162, %s176
      %p178 = scmp.eq.s32.totalorder %s37, 0
      %p179 = por %p177, %p178
      %s181 = sadd.s32 %s180, 1
      %p184 = scmp.eq.s32.totalorder %s31, 1
      %p185 = scmp.ne.s32.totalorder %s180, %s182
      %p186 = scmp.eq.s32.totalorder %s31, 0
      %p187 = por %p185, %p186
      %p188 = scmp.ne.s32.totalorder %s180, %s182
      %p189 = scmp.eq.s32.totalorder %s36, 1
      %p190 = por %p188, %p189
      %p191 = scmp.ne.s32.totalorder %s182, %s183
      %p192 = scmp.eq.s32.totalorder %s36, 0
      %p193 = por %p191, %p192
      %p194 = scmp.ne.s32.totalorder %s182, %s183
      %p195 = scmp.eq.s32.totalorder %s37, 1
      %p196 = por %p194, %p195
      %p198 = scmp.ne.s32.totalorder %s183, %s197
      %p199 = scmp.eq.s32.totalorder %s37, 0
      %p200 = por %p198, %p199
      %s202 = sadd.s32 %s201, 1
      %p205 = scmp.eq.s32.totalorder %s31, 1
      %p206 = scmp.ne.s32.totalorder %s201, %s203
      %p207 = scmp.eq.s32.totalorder %s31, 0
      %p208 = por %p206, %p207
      %p209 = scmp.ne.s32.totalorder %s201, %s203
      %p210 = scmp.eq.s32.totalorder %s36, 1
      %p211 = por %p209, %p210
      %p212 = scmp.ne.s32.totalorder %s203, %s204
      %p213 = scmp.eq.s32.totalorder %s36, 0
      %p214 = por %p212, %p213
      %p215 = scmp.ne.s32.totalorder %s203, %s204
      %p216 = scmp.eq.s32.totalorder %s37, 1
      %p217 = por %p215, %p216
      %p219 = scmp.ne.s32.totalorder %s204, %s218
      %p220 = scmp.eq.s32.totalorder %s37, 0
      %p221 = por %p219, %p220
      %s223 = sadd.s32 %s222, 1
      %p226 = scmp.eq.s32.totalorder %s31, 1
      %p227 = scmp.ne.s32.totalorder %s222, %s224
      %p228 = scmp.eq.s32.totalorder %s31, 0
      %p229 = por %p227, %p228
      %p230 = scmp.ne.s32.totalorder %s222, %s224
      %p231 = scmp.eq.s32.totalorder %s36, 1
      %p232 = por %p230, %p231
      %p233 = scmp.ne.s32.totalorder %s224, %s225
      %p234 = scmp.eq.s32.totalorder %s36, 0
      %p235 = por %p233, %p234
      %p236 = scmp.ne.s32.totalorder %s224, %s225
      %p237 = scmp.eq.s32.totalorder %s37, 1
      %p238 = por %p236, %p237
      %p240 = scmp.ne.s32.totalorder %s225, %s239
      %p241 = scmp.eq.s32.totalorder %s37, 0
      %p242 = por %p240, %p241
      %s244 = sadd.s32 %s243, 1
      %p247 = scmp.eq.s32.totalorder %s31, 1
      %p248 = scmp.ne.s32.totalorder %s243, %s245
      %p249 = scmp.eq.s32.totalorder %s31, 0
      %p250 = por %p248, %p249
      %p251 = scmp.ne.s32.totalorder %s243, %s245
      %p252 = scmp.eq.s32.totalorder %s36, 1
      %p253 = por %p251, %p252
      %p254 = scmp.ne.s32.totalorder %s245, %s246
      %p255 = scmp.eq.s32.totalorder %s36, 0
      %p256 = por %p254, %p255
      %p257 = scmp.ne.s32.totalorder %s245, %s246
      %p258 = scmp.eq.s32.totalorder %s37, 1
      %p259 = por %p257, %p258
      %p261 = scmp.ne.s32.totalorder %s246, %s260
      %p262 = scmp.eq.s32.totalorder %s37, 0
      %p263 = por %p261, %p262
      %s265 = sadd.s32 %s264, 1
      %p268 = scmp.eq.s32.totalorder %s31, 1
      %p269 = scmp.ne.s32.totalorder %s264, %s266
      %p270 = scmp.eq.s32.totalorder %s31, 0
      %p271 = por %p269, %p270
      %p272 = scmp.ne.s32.totalorder %s264, %s266
      %p273 = scmp.eq.s32.totalorder %s36, 1
      %p274 = por %p272, %p273
      %p275 = scmp.ne.s32.totalorder %s266, %s267
      %p276 = scmp.eq.s32.totalorder %s36, 0
      %p277 = por %p275, %p276
      %p278 = scmp.ne.s32.totalorder %s266, %s267
      %p279 = scmp.eq.s32.totalorder %s37, 1
      %p280 = por %p278, %p279
      %p282 = scmp.ne.s32.totalorder %s267, %s281
      %p283 = scmp.eq.s32.totalorder %s37, 0
      %p284 = por %p282, %p283
      %s286 = sadd.s32 %s285, 1
      %p289 = scmp.eq.s32.totalorder %s31, 1
      %p290 = scmp.ne.s32.totalorder %s285, %s287
      %p291 = scmp.eq.s32.totalorder %s31, 0
      %p292 = por %p290, %p291
      %p293 = scmp.ne.s32.totalorder %s285, %s287
      %p294 = scmp.eq.s32.totalorder %s36, 1
      %p295 = por %p293, %p294
      %p296 = scmp.ne.s32.totalorder %s287, %s288
      %p297 = scmp.eq.s32.totalorder %s36, 0
      %p298 = por %p296, %p297
      %p299 = scmp.ne.s32.totalorder %s287, %s288
      %p300 = scmp.eq.s32.totalorder %s37, 1
      %p301 = por %p299, %p300
      %p303 = scmp.ne.s32.totalorder %s288, %s302
      %p304 = scmp.eq.s32.totalorder %s37, 0
      %p305 = por %p303, %p304
      %s307 = sadd.s32 %s306, 1
      %p310 = scmp.eq.s32.totalorder %s31, 1
      %p311 = scmp.ne.s32.totalorder %s306, %s308
      %p312 = scmp.eq.s32.totalorder %s31, 0
      %p313 = por %p311, %p312
      %p314 = scmp.ne.s32.totalorder %s306, %s308
      %p315 = scmp.eq.s32.totalorder %s36, 1
      %p316 = por %p314, %p315
      %p317 = scmp.ne.s32.totalorder %s308, %s309
      %p318 = scmp.eq.s32.totalorder %s36, 0
      %p319 = por %p317, %p318
      %p320 = scmp.ne.s32.totalorder %s308, %s309
      %p321 = scmp.eq.s32.totalorder %s37, 1
      %p322 = por %p320, %p321
      %p324 = scmp.ne.s32.totalorder %s309, %s323
      %p325 = scmp.eq.s32.totalorder %s37, 0
      %p326 = por %p324, %p325
      %s328 = sadd.s32 %s327, 1
      %p331 = scmp.eq.s32.totalorder %s31, 1
      %p332 = scmp.ne.s32.totalorder %s327, %s329
      %p333 = scmp.eq.s32.totalorder %s31, 0
      %p334 = por %p332, %p333
      %p335 = scmp.ne.s32.totalorder %s327, %s329
      %p336 = scmp.eq.s32.totalorder %s36, 1
      %p337 = por %p335, %p336
      %p338 = scmp.ne.s32.totalorder %s329, %s330
      %p339 = scmp.eq.s32.totalorder %s36, 0
      %p340 = por %p338, %p339
      %p341 = scmp.ne.s32.totalorder %s329, %s330
      %p342 = scmp.eq.s32.totalorder %s37, 1
      %p343 = por %p341, %p342
      %p345 = scmp.ne.s32.totalorder %s330, %s344
      %p346 = scmp.eq.s32.totalorder %s37, 0
      %p347 = por %p345, %p346
      %s348 = ssub.s32 %s31, %s38
      %p349 = scmp.eq.s32.totalorder %s348, 0
      %s351 = sadd.s32 %s350, 1
      %s352 = scalar_select %p349, %s350, %s351
      %p355 = pneg %p349
      %p356 = scmp.eq.s32.totalorder %s31, 1
      %p357 = por %p355, %p356
      %p358 = scmp.ne.s32.totalorder %s350, %s353
      %p359 = scmp.eq.s32.totalorder %s31, 0
      %p360 = por %p358, %p359
      %p361 = scmp.ne.s32.totalorder %s350, %s353
      %p362 = scmp.eq.s32.totalorder %s36, 1
      %p363 = por %p361, %p362
      %p364 = scmp.ne.s32.totalorder %s353, %s354
      %p365 = scmp.eq.s32.totalorder %s36, 0
      %p366 = por %p364, %p365
      %p367 = scmp.ne.s32.totalorder %s353, %s354
      %p368 = scmp.eq.s32.totalorder %s37, 1
      %p369 = por %p367, %p368
      %p371 = scmp.ne.s32.totalorder %s354, %s370
      %p372 = scmp.eq.s32.totalorder %s37, 0
      %p373 = por %p371, %p372
      %p374 = scmp.le.s32.totalorder 1, %s31
      %p375 = scmp.lt.s32.totalorder %s31, 3
      %p376 = pnand %p374, %p375
      %p377 = pneg %p376
      // Predicated region
      $region9: #{tpu_custom_call.1} parent=5 // pred_check
        _
      $region10: #{tpu_custom_call.1} parent=5 // pred_check_branch
        %379 = sbr.rel (%p376) target = $region12
      $region11: #{tpu_custom_call.1} parent=5 // pred_region
        %s380 = ssub.s32 %s31, 1
        // Predicated region
        $region13: #{tpu_custom_call.1} parent=11 // pred_check
          %p381 = pneg %p130
        $region14: #{tpu_custom_call.1} parent=11 // pred_check_branch
          %383 = sbr.rel (%p381) target = $region16
        $region15: #{tpu_custom_call.1} parent=11 // pred_region
          %s385 = ssub.s32 2048, 2048
          %386 = vsyncadd [#allocation9], %s385
          %s387 = sshll.u32 [#allocation8], 4
          %s388 = int_to_ptr.vmem [resolvable:$true] %s387
          %393 = dma.hbm_to_vmem [thread:$0]  %s3, 2048, %s388, [#allocation9], 128, 128, 8
        $region16: #{tpu_custom_call.1} parent=11 // pred_fallthru
          _
        // Predicated region
        $region17: #{tpu_custom_call.1} parent=11 // pred_check
          %p394 = pneg %p151
        $region18: #{tpu_custom_call.1} parent=11 // pred_check_branch
          %396 = sbr.rel (%p394) target = $region20
        $region19: #{tpu_custom_call.1} parent=11 // pred_region
          %s398 = ssub.s32 2048, 2048
          %399 = vsyncadd [#allocation9], %s398
          %s400 = sshll.u32 [#allocation10], 4
          %s401 = int_to_ptr.vmem [resolvable:$true] %s400
          %406 = dma.hbm_to_vmem [thread:$0]  %s4, 2048, %s401, [#allocation9], 128, 128, 8
        $region20: #{tpu_custom_call.1} parent=11 // pred_fallthru
          _
        // Predicated region
        $region21: #{tpu_custom_call.1} parent=11 // pred_check
          %p407 = pneg %p172
        $region22: #{tpu_custom_call.1} parent=11 // pred_check_branch
          %409 = sbr.rel (%p407) target = $region24
        $region23: #{tpu_custom_call.1} parent=11 // pred_region
          _
        $region24: #{tpu_custom_call.1} parent=11 // pred_fallthru
          _
        // Predicated region
        $region25: #{tpu_custom_call.1} parent=11 // pred_check
          %p410 = pneg %p193
        $region26: #{tpu_custom_call.1} parent=11 // pred_check_branch
          %412 = sbr.rel (%p410) target = $region28
        $region27: #{tpu_custom_call.1} parent=11 // pred_region
          _
        $region28: #{tpu_custom_call.1} parent=11 // pred_fallthru
          _
        // Predicated region
        $region29: #{tpu_custom_call.1} parent=11 // pred_check
          %p413 = pneg %p214
        $region30: #{tpu_custom_call.1} parent=11 // pred_check_branch
          %415 = sbr.rel (%p413) target = $region32
        $region31: #{tpu_custom_call.1} parent=11 // pred_region
          _
        $region32: #{tpu_custom_call.1} parent=11 // pred_fallthru
          _
        // Predicated region
        $region33: #{tpu_custom_call.1} parent=11 // pred_check
          %p416 = pneg %p235
        $region34: #{tpu_custom_call.1} parent=11 // pred_check_branch
          %418 = sbr.rel (%p416) target = $region36
        $region35: #{tpu_custom_call.1} parent=11 // pred_region
          %s420 = ssub.s32 4096, 4096
          %421 = vsyncadd [#allocation12], %s420
          %s422 = sshll.u32 [#allocation11], 4
          %s423 = int_to_ptr.vmem [resolvable:$true] %s422
          %428 = dma.hbm_to_vmem [thread:$0]  %s8, 4096, %s423, [#allocation12], 256, 256, 16
        $region36: #{tpu_custom_call.1} parent=11 // pred_fallthru
          _
        // Predicated region
        $region37: #{tpu_custom_call.1} parent=11 // pred_check
          %p429 = pneg %p256
        $region38: #{tpu_custom_call.1} parent=11 // pred_check_branch
          %431 = sbr.rel (%p429) target = $region40
        $region39: #{tpu_custom_call.1} parent=11 // pred_region
          _
        $region40: #{tpu_custom_call.1} parent=11 // pred_fallthru
          _
        // Predicated region
        $region41: #{tpu_custom_call.1} parent=11 // pred_check
          %p432 = pneg %p277
        $region42: #{tpu_custom_call.1} parent=11 // pred_check_branch
          %434 = sbr.rel (%p432) target = $region44
        $region43: #{tpu_custom_call.1} parent=11 // pred_region
          %s436 = ssub.s32 4096, 4096
          %437 = vsyncadd [#allocation12], %s436
          %s438 = sshll.u32 [#allocation13], 4
          %s439 = int_to_ptr.vmem [resolvable:$true] %s438
          %444 = dma.hbm_to_vmem [thread:$0]  %s10, 4096, %s439, [#allocation12], 128, 128, 8
        $region44: #{tpu_custom_call.1} parent=11 // pred_fallthru
          _
        // Predicated region
        $region45: #{tpu_custom_call.1} parent=11 // pred_check
          %p445 = pneg %p298
        $region46: #{tpu_custom_call.1} parent=11 // pred_check_branch
          %447 = sbr.rel (%p445) target = $region48
        $region47: #{tpu_custom_call.1} parent=11 // pred_region
          _
        $region48: #{tpu_custom_call.1} parent=11 // pred_fallthru
          _
        // Predicated region
        $region49: #{tpu_custom_call.1} parent=11 // pred_check
          %p448 = pneg %p319
        $region50: #{tpu_custom_call.1} parent=11 // pred_check_branch
          %450 = sbr.rel (%p448) target = $region52
        $region51: #{tpu_custom_call.1} parent=11 // pred_region
          _
        $region52: #{tpu_custom_call.1} parent=11 // pred_fallthru
          _
        // Predicated region
        $region53: #{tpu_custom_call.1} parent=11 // pred_check
          %p451 = pneg %p340
        $region54: #{tpu_custom_call.1} parent=11 // pred_check_branch
          %453 = sbr.rel (%p451) target = $region56
        $region55: #{tpu_custom_call.1} parent=11 // pred_region
          _
        $region56: #{tpu_custom_call.1} parent=11 // pred_fallthru
          _
      $region12: #{tpu_custom_call.1} parent=5 // pred_fallthru
        _
      %p454 = scmp.lt.s32.totalorder %s31, 2
      // Predicated region
      $region57: #{tpu_custom_call.1} parent=5 // pred_check
        %p455 = pneg %p454
      $region58: #{tpu_custom_call.1} parent=5 // pred_check_branch
        %457 = sbr.rel (%p455) target = $region60
      $region59: #{tpu_custom_call.1} parent=5 // pred_region
        // Predicated region
        $region61: #{tpu_custom_call.1} parent=59 // pred_check
          %p458 = pneg %p51
        $region62: #{tpu_custom_call.1} parent=59 // pred_check_branch
          %460 = sbr.rel (%p458) target = $region64
        $region63: #{tpu_custom_call.1} parent=59 // pred_region
          %s461 = sand.u32 %s41, 1
          %s462 = scalar_lea.sflag [#allocation3], %s461
          %s463 = sand.u32 %s41, 1
          %s464 = smul.addr %s463, 8
          %s465 = scalar_lea.vmem [#allocation2], %s464
          %s467 = ssub.s32 128, 128
          %468 = vsyncadd %s462, %s467
          %s469 = smul.addr %s31, 128
          %s470 = scalar_lea.hbm %s0, %s469
          %s472 = sshll.u32 %s465, 4
          %s473 = int_to_ptr.vmem [resolvable:$true] %s472
          %475 = dma.hbm_to_vmem [thread:$0]  %s470, 128, %s473, %s462
        $region64: #{tpu_custom_call.1} parent=59 // pred_fallthru
          _
        // Predicated region
        $region65: #{tpu_custom_call.1} parent=59 // pred_check
          %p476 = pneg %p77
        $region66: #{tpu_custom_call.1} parent=59 // pred_check_branch
          %478 = sbr.rel (%p476) target = $region68
        $region67: #{tpu_custom_call.1} parent=59 // pred_region
          %s479 = sand.u32 %s31, 1
          %s480 = scalar_lea.sflag [#allocation6], %s479
          %s481 = sand.u32 %s67, 1
          %s482 = smul.addr %s481, 128
          %s483 = scalar_lea.vmem [#allocation5], %s482
          %s484 = smul.u32 8, %s31
          %s486 = ssub.s32 2048, 2048
          %487 = vsyncadd %s480, %s486
          %s488 = smul.addr %s484, 2
          %s489 = smul.addr %s488, 128
          %s490 = scalar_lea.hbm %s1, %s489
          %s491 = sshll.u32 %s483, 4
          %s492 = int_to_ptr.vmem [resolvable:$true] %s491
          %497 = dma.hbm_to_vmem [thread:$0]  %s490, 2048, %s492, %s480, 128, 128, 8
        $region68: #{tpu_custom_call.1} parent=59 // pred_fallthru
          _
        // Predicated region
        $region69: #{tpu_custom_call.1} parent=59 // pred_check
          %p498 = pneg %p103
        $region70: #{tpu_custom_call.1} parent=59 // pred_check_branch
          %500 = sbr.rel (%p498) target = $region72
        $region71: #{tpu_custom_call.1} parent=59 // pred_region
          %s501 = sand.u32 %s31, 1
          %s502 = scalar_lea.sflag [#allocation6], %s501
          %s503 = sand.u32 %s93, 1
          %s504 = smul.addr %s503, 8
          %s505 = scalar_lea.vmem [#allocation7], %s504
          %s507 = ssub.s32 128, 128
          %508 = vsyncadd %s502, %s507
          %s509 = smul.addr %s31, 128
          %s510 = scalar_lea.hbm %s2, %s509
          %s512 = sshll.u32 %s505, 4
          %s513 = int_to_ptr.vmem [resolvable:$true] %s512
          %515 = dma.hbm_to_vmem [thread:$0]  %s510, 128, %s513, %s502
        $region72: #{tpu_custom_call.1} parent=59 // pred_fallthru
          _
      $region60: #{tpu_custom_call.1} parent=5 // pred_fallthru
        _
      %p516 = scmp.le.s32.totalorder 1, %s31
      %p517 = scmp.lt.s32.totalorder %s31, 3
      %p518 = pnand %p516, %p517
      %p519 = pneg %p518
      // Predicated region
      $region73: #{tpu_custom_call.1} parent=5 // pred_check
        _
      $region74: #{tpu_custom_call.1} parent=5 // pred_check_branch
        %521 = sbr.rel (%p518) target = $region76
      $region75: #{tpu_custom_call.1} parent=5 // pred_region
        %s522 = ssub.s32 %s31, 1
        %s523 = sand.u32 %s44, 1
        %s524 = scalar_lea.sflag [#allocation3], %s523
        %s525 = sand.u32 %s44, 1
        %s526 = smul.addr %s525, 8
        %s527 = scalar_lea.vmem [#allocation2], %s526
        // Predicated region
        $region77: #{tpu_custom_call.1} parent=75 // pred_check
          %p528 = pneg %p57
        $region78: #{tpu_custom_call.1} parent=75 // pred_check_branch
          %530 = sbr.rel (%p528) target = $region80
        $region79: #{tpu_custom_call.1} parent=75 // pred_region
          %531 = dma.done %s524, 128
        $region80: #{tpu_custom_call.1} parent=75 // pred_fallthru
          _
        %s532 = sand.u32 %s36, 1
        %s533 = scalar_lea.sflag [#allocation6], %s532
        %s534 = sand.u32 %s70, 1
        %s535 = smul.addr %s534, 128
        %s536 = scalar_lea.vmem [#allocation5], %s535
        // Predicated region
        $region81: #{tpu_custom_call.1} parent=75 // pred_check
          %p537 = pneg %p83
        $region82: #{tpu_custom_call.1} parent=75 // pred_check_branch
          %539 = sbr.rel (%p537) target = $region84
        $region83: #{tpu_custom_call.1} parent=75 // pred_region
          %540 = dma.done %s533, 2048
        $region84: #{tpu_custom_call.1} parent=75 // pred_fallthru
          _
        %s541 = sand.u32 %s36, 1
        %s542 = scalar_lea.sflag [#allocation6], %s541
        %s543 = sand.u32 %s96, 1
        %s544 = smul.addr %s543, 8
        %s545 = scalar_lea.vmem [#allocation7], %s544
        // Predicated region
        $region85: #{tpu_custom_call.1} parent=75 // pred_check
          %p546 = pneg %p109
        $region86: #{tpu_custom_call.1} parent=75 // pred_check_branch
          %548 = sbr.rel (%p546) target = $region88
        $region87: #{tpu_custom_call.1} parent=75 // pred_region
          %549 = dma.done %s542, 128
        $region88: #{tpu_custom_call.1} parent=75 // pred_fallthru
          _
        // Predicated region
        $region89: #{tpu_custom_call.1} parent=75 // pred_check
          %p550 = pneg %p130
        $region90: #{tpu_custom_call.1} parent=75 // pred_check_branch
          %552 = sbr.rel (%p550) target = $region92
        $region91: #{tpu_custom_call.1} parent=75 // pred_region
          %553 = dma.done [#allocation9], 2048
        $region92: #{tpu_custom_call.1} parent=75 // pred_fallthru
          _
        // Predicated region
        $region93: #{tpu_custom_call.1} parent=75 // pred_check
          %p554 = pneg %p151
        $region94: #{tpu_custom_call.1} parent=75 // pred_check_branch
          %556 = sbr.rel (%p554) target = $region96
        $region95: #{tpu_custom_call.1} parent=75 // pred_region
          %557 = dma.done [#allocation9], 2048
        $region96: #{tpu_custom_call.1} parent=75 // pred_fallthru
          _
        // Predicated region
        $region97: #{tpu_custom_call.1} parent=75 // pred_check
          %p558 = pneg %p235
        $region98: #{tpu_custom_call.1} parent=75 // pred_check_branch
          %560 = sbr.rel (%p558) target = $region100
        $region99: #{tpu_custom_call.1} parent=75 // pred_region
          %561 = dma.done [#allocation12], 4096
        $region100: #{tpu_custom_call.1} parent=75 // pred_fallthru
          _
        // Predicated region
        $region101: #{tpu_custom_call.1} parent=75 // pred_check
          %p562 = pneg %p277
        $region102: #{tpu_custom_call.1} parent=75 // pred_check_branch
          %564 = sbr.rel (%p562) target = $region104
        $region103: #{tpu_custom_call.1} parent=75 // pred_region
          %565 = dma.done [#allocation12], 4096
        $region104: #{tpu_custom_call.1} parent=75 // pred_fallthru
          _
        %s566 = sand.u32 %s44, 1
        %s567 = scalar_lea.sflag [#allocation3], %s566
        %s568 = sand.u32 %s44, 1
        %s569 = smul.addr %s568, 8
        %s570 = scalar_lea.vmem [#allocation2], %s569
        %p571 = pneg %p57
        %p572 = pneg %p54
        %s573 = sand.u32 %s36, 1
        %s574 = scalar_lea.sflag [#allocation6], %s573
        %s575 = sand.u32 %s70, 1
        %s576 = smul.addr %s575, 128
        %s577 = scalar_lea.vmem [#allocation5], %s576
        %p578 = pneg %p83
        %p579 = pneg %p80
        %s580 = sand.u32 %s36, 1
        %s581 = scalar_lea.sflag [#allocation6], %s580
        %s582 = sand.u32 %s96, 1
        %s583 = smul.addr %s582, 8
        %s584 = scalar_lea.vmem [#allocation7], %s583
        %p585 = pneg %p109
        %p586 = pneg %p106
        %p587 = pneg %p130
        %p588 = pneg %p127
        %p589 = pneg %p151
        %p590 = pneg %p148
        %p591 = pneg %p172
        %p592 = pneg %p169
        %p593 = pneg %p193
        %p594 = pneg %p190
        %p595 = pneg %p214
        %p596 = pneg %p211
        %p597 = pneg %p235
        %p598 = pneg %p232
        %p599 = pneg %p256
        %p600 = pneg %p253
        %p601 = pneg %p277
        %p602 = pneg %p274
        %p603 = pneg %p298
        %p604 = pneg %p295
        %p605 = pneg %p319
        %p606 = pneg %p316
        %p607 = pneg %p340
        %p608 = pneg %p337
        %p609 = pneg %p366
        %p610 = pneg %p363
        %s611 = sand.u32 %s353, 1
        %s612 = scalar_lea.sflag [#allocation4], %s611
        %s613 = sand.u32 %s353, 1
        %s614 = smul.addr %s613, 8
        %s615 = scalar_lea.vmem [#allocation14], %s614
        %s616 = smul.u32 8, %s36
        %v617 = vld [vmem:[%s536] sm:$0xff]
        %v618 = vld [vmem:[%s536 + $0x8] sm:$0xff]
        %v619 = vld [vmem:[%s536 + $0x10] sm:$0xff]
        %v620 = vld [vmem:[%s536 + $0x18] sm:$0xff]
        %v621 = vld [vmem:[%s536 + $0x20] sm:$0xff]
        %v622 = vld [vmem:[%s536 + $0x28] sm:$0xff]
        %v623 = vld [vmem:[%s536 + $0x30] sm:$0xff]
        %v624 = vld [vmem:[%s536 + $0x38] sm:$0xff]
        %v625 = vld [vmem:[%s536 + $0x40] sm:$0xff]
        %v626 = vld [vmem:[%s536 + $0x48] sm:$0xff]
        %v627 = vld [vmem:[%s536 + $0x50] sm:$0xff]
        %v628 = vld [vmem:[%s536 + $0x58] sm:$0xff]
        %v629 = vld [vmem:[%s536 + $0x60] sm:$0xff]
        %v630 = vld [vmem:[%s536 + $0x68] sm:$0xff]
        %v631 = vld [vmem:[%s536 + $0x70] sm:$0xff]
        %v632 = vld [vmem:[%s536 + $0x78] sm:$0xff]
        %v633 = vld [vmem:[%s527] sm:$0xff]
        %v634 = vld [vmem:[%s545] sm:$0xff]
        %v635 = vadd.f32 %v617, %v618
        %v636 = vrot.slane %v635, 4
        %v637 = vadd.f32 %v635, %v636
        %v638 = vrot.slane %v637, 2
        %v639 = vadd.f32 %v637, %v638
        %v640 = vrot.slane %v639, 1
        %v641 = vadd.f32 %v639, %v640
        %v642 = vadd.f32 %v619, %v620
        %v643 = vrot.slane %v642, 4
        %v644 = vadd.f32 %v642, %v643
        %v645 = vrot.slane %v644, 2
        %v646 = vadd.f32 %v644, %v645
        %v647 = vrot.slane %v646, 1
        %v648 = vadd.f32 %v646, %v647
        %v649 = vadd.f32 %v621, %v622
        %v650 = vrot.slane %v649, 4
        %v651 = vadd.f32 %v649, %v650
        %v652 = vrot.slane %v651, 2
        %v653 = vadd.f32 %v651, %v652
        %v654 = vrot.slane %v653, 1
        %v655 = vadd.f32 %v653, %v654
        %v656 = vadd.f32 %v623, %v624
        %v657 = vrot.slane %v656, 4
        %v658 = vadd.f32 %v656, %v657
        %v659 = vrot.slane %v658, 2
        %v660 = vadd.f32 %v658, %v659
        %v661 = vrot.slane %v660, 1
        %v662 = vadd.f32 %v660, %v661
        %v663 = vadd.f32 %v625, %v626
        %v664 = vrot.slane %v663, 4
        %v665 = vadd.f32 %v663, %v664
        %v666 = vrot.slane %v665, 2
        %v667 = vadd.f32 %v665, %v666
        %v668 = vrot.slane %v667, 1
        %v669 = vadd.f32 %v667, %v668
        %v670 = vadd.f32 %v627, %v628
        %v671 = vrot.slane %v670, 4
        %v672 = vadd.f32 %v670, %v671
        %v673 = vrot.slane %v672, 2
        %v674 = vadd.f32 %v672, %v673
        %v675 = vrot.slane %v674, 1
        %v676 = vadd.f32 %v674, %v675
        %v677 = vadd.f32 %v629, %v630
        %v678 = vrot.slane %v677, 4
        %v679 = vadd.f32 %v677, %v678
        %v680 = vrot.slane %v679, 2
        %v681 = vadd.f32 %v679, %v680
        %v682 = vrot.slane %v681, 1
        %v683 = vadd.f32 %v681, %v682
        %v684 = vadd.f32 %v631, %v632
        %v685 = vrot.slane %v684, 4
        %v686 = vadd.f32 %v684, %v685
        %v687 = vrot.slane %v686, 2
        %v688 = vadd.f32 %v686, %v687
        %v689 = vrot.slane %v688, 1
        %v690 = vadd.f32 %v688, %v689
        %v691 = vrcp.pop 16.0
        %v692 = vmul.f32 %v641, %v691
        %v693 = vmul.f32 %v648, %v691
        %v694 = vmul.f32 %v655, %v691
        %v695 = vmul.f32 %v662, %v691
        %v696 = vmul.f32 %v669, %v691
        %v697 = vmul.f32 %v676, %v691
        %v698 = vmul.f32 %v683, %v691
        %v699 = vmul.f32 %v690, %v691
        %v700 = vld [vmem:[#allocation8] sm:$0xff]
        %v701 = vld [vmem:[#allocation8 + $0x8] sm:$0xff]
        %v702 = vld [vmem:[#allocation8 + $0x10] sm:$0xff]
        %v703 = vld [vmem:[#allocation8 + $0x18] sm:$0xff]
        %v704 = vld [vmem:[#allocation8 + $0x20] sm:$0xff]
        %v705 = vld [vmem:[#allocation8 + $0x28] sm:$0xff]
        %v706 = vld [vmem:[#allocation8 + $0x30] sm:$0xff]
        %v707 = vld [vmem:[#allocation8 + $0x38] sm:$0xff]
        %v708 = vld [vmem:[#allocation8 + $0x40] sm:$0xff]
        %v709 = vld [vmem:[#allocation8 + $0x48] sm:$0xff]
        %v710 = vld [vmem:[#allocation8 + $0x50] sm:$0xff]
        %v711 = vld [vmem:[#allocation8 + $0x58] sm:$0xff]
        %v712 = vld [vmem:[#allocation8 + $0x60] sm:$0xff]
        %v713 = vld [vmem:[#allocation8 + $0x68] sm:$0xff]
        %v714 = vld [vmem:[#allocation8 + $0x70] sm:$0xff]
        %v715 = vld [vmem:[#allocation8 + $0x78] sm:$0xff]
        %716 = vmatprep.subr.mxu0 0.0
        %717 = vmatpush1.msra.mxu0 %v700
        %718 = vmatprep.subr.mxu0 0.0
        %719 = vmatpush1.msra.mxu0 %v701
        %720 = vmatprep.subr.mxu0 0.0
        %721 = vmatpush1.msra.mxu0 %v702
        %722 = vmatprep.subr.mxu0 0.0
        %723 = vmatpush1.msra.mxu0 %v703
        %724 = vmatprep.subr.mxu0 0.0
        %725 = vmatpush1.msra.mxu0 %v704
        %726 = vmatprep.subr.mxu0 0.0
        %727 = vmatpush1.msra.mxu0 %v705
        %728 = vmatprep.subr.mxu0 0.0
        %729 = vmatpush1.msra.mxu0 %v706
        %730 = vmatprep.subr.mxu0 0.0
        %731 = vmatpush1.msra.mxu0 %v707
        %732 = vmatprep.subr.mxu0 0.0
        %733 = vmatpush1.msra.mxu0 %v708
        %734 = vmatprep.subr.mxu0 0.0
        %735 = vmatpush1.msra.mxu0 %v709
        %736 = vmatprep.subr.mxu0 0.0
        %737 = vmatpush1.msra.mxu0 %v710
        %738 = vmatprep.subr.mxu0 0.0
        %739 = vmatpush1.msra.mxu0 %v711
        %740 = vmatprep.subr.mxu0 0.0
        %741 = vmatpush1.msra.mxu0 %v712
        %742 = vmatprep.subr.mxu0 0.0
        %743 = vmatpush1.msra.mxu0 %v713
        %744 = vmatprep.subr.mxu0 0.0
        %745 = vmatpush1.msra.mxu0 %v714
        %746 = vmatprep.subr.mxu0 0.0
        %747 = vmatpush1.msra.mxu0 %v715
        %748 = vmatprep.subr.mxu0 0.0
        %749 = vmatpush1.msra.mxu0 0.0
        %750 = vmatprep.subr.mxu0 0.0
        %751 = vmatpush1.msra.mxu0 0.0
        %752 = vmatprep.subr.mxu0 0.0
        %753 = vmatpush1.msra.mxu0 0.0
        %754 = vmatprep.subr.mxu0 0.0
        %755 = vmatpush1.msra.mxu0 0.0
        %756 = vmatprep.subr.mxu0 0.0
        %757 = vmatpush1.msra.mxu0 0.0
        %758 = vmatprep.subr.mxu0 0.0
        %759 = vmatpush1.msra.mxu0 0.0
        %760 = vmatprep.subr.mxu0 0.0
        %761 = vmatpush1.msra.mxu0 0.0
        %762 = vmatprep.subr.mxu0 0.0
        %763 = vmatpush1.msra.mxu0 0.0
        %764 = vmatprep.subr.mxu0 0.0
        %765 = vmatpush1.msra.mxu0 0.0
        %766 = vmatprep.subr.mxu0 0.0
        %767 = vmatpush1.msra.mxu0 0.0
        %768 = vmatprep.subr.mxu0 0.0
        %769 = vmatpush1.msra.mxu0 0.0
        %770 = vmatprep.subr.mxu0 0.0
        %771 = vmatpush1.msra.mxu0 0.0
        %772 = vmatprep.subr.mxu0 0.0
        %773 = vmatpush1.msra.mxu0 0.0
        %774 = vmatprep.subr.mxu0 0.0
        %775 = vmatpush1.msra.mxu0 0.0
        %776 = vmatprep.subr.mxu0 0.0
        %777 = vmatpush1.msra.mxu0 0.0
        %778 = vmatprep.subr.mxu0 0.0
        %779 = vmatpush1.msra.mxu0 0.0
        %780 = vmatprep.mubr.f32.mxu0 0.0
        %781 = vmatmul.mubr.f32.gmra.mrb[0].mxu0 %v634
        %v782 = vpop.f32.mrb[0].mxu0
        %v783 = vadd.f32 0.0, %v782
        %v784 = vpop.f32.mrb[0].mxu0
        %785 = vdwg.mxu0
        %v787 = vcombine.high %v783, %v783
        %v789 = vunpack.c.l.s4 1966171168
        %v790 = vunpack.c.0.s8 %v789
        %v791 = vlaneseq
        %v792 = vshrl.u32 %v791, 7
        %v793 = vsub.s32 %v790, %v792
        %v794 = vrot.slane %v783, %v793
        %v796 = vunpack.c.l.s4 1966171168
        %v797 = vunpack.c.0.s8 %v796
        %v798 = vlaneseq
        %v799 = vshrl.u32 %v798, 7
        %v800 = vsub.s32 %v797, %v799
        %v801 = vrot.slane %v787, %v800
        %v802 = vcombine.high %v794, %v794
        %v803 = vcombine.high %v801, %v801
        %v805 = vunpack.c.l.s4 1966171168
        %v806 = vunpack.c.0.s8 %v805
        %v807 = vlaneseq
        %v808 = vshrl.u32 %v807, 7
        %v809 = vsub.s32 %v806, %v808
        %v810 = vrot.slane %v794, %v809
        %v812 = vunpack.c.l.s4 1966171168
        %v813 = vunpack.c.0.s8 %v812
        %v814 = vlaneseq
        %v815 = vshrl.u32 %v814, 7
        %v816 = vsub.s32 %v813, %v815
        %v817 = vrot.slane %v801, %v816
        %v819 = vunpack.c.l.s4 1966171168
        %v820 = vunpack.c.0.s8 %v819
        %v821 = vlaneseq
        %v822 = vshrl.u32 %v821, 7
        %v823 = vsub.s32 %v820, %v822
        %v824 = vrot.slane %v802, %v823
        %v826 = vunpack.c.l.s4 1966171168
        %v827 = vunpack.c.0.s8 %v826
        %v828 = vlaneseq
        %v829 = vshrl.u32 %v828, 7
        %v830 = vsub.s32 %v827, %v829
        %v831 = vrot.slane %v803, %v830
        %v832 = vcombine.high %v810, %v810
        %v833 = vcombine.high %v817, %v817
        %v834 = vcombine.high %v824, %v824
        %v835 = vcombine.high %v831, %v831
        %v836 = vlaneseq
        %v837 = vshrl.u32 %v836, 7
        %v838 = vsub.s32 0, %v837
        %v839 = vrot.slane %v810, %v838
        %v840 = vlaneseq
        %v841 = vshrl.u32 %v840, 7
        %v842 = vsub.s32 0, %v841
        %v843 = vrot.slane %v824, %v842
        %v844 = vlaneseq
        %v845 = vshrl.u32 %v844, 7
        %v846 = vsub.s32 0, %v845
        %v847 = vrot.slane %v832, %v846
        %v848 = vlaneseq
        %v849 = vshrl.u32 %v848, 7
        %v850 = vsub.s32 0, %v849
        %v851 = vrot.slane %v834, %v850
        %v852 = vlaneseq
        %v853 = vshrl.u32 %v852, 7
        %v854 = vsub.s32 0, %v853
        %v855 = vrot.slane %v817, %v854
        %v856 = vlaneseq
        %v857 = vshrl.u32 %v856, 7
        %v858 = vsub.s32 0, %v857
        %v859 = vrot.slane %v831, %v858
        %v860 = vlaneseq
        %v861 = vshrl.u32 %v860, 7
        %v862 = vsub.s32 0, %v861
        %v863 = vrot.slane %v833, %v862
        %v864 = vlaneseq
        %v865 = vshrl.u32 %v864, 7
        %v866 = vsub.s32 0, %v865
        %v867 = vrot.slane %v835, %v866
        %v876 = vmul.f32 %v839, %v617
        %v877 = vmul.f32 %v839, %v618
        %v878 = vmul.f32 %v843, %v619
        %v879 = vmul.f32 %v843, %v620
        %v880 = vmul.f32 %v847, %v621
        %v881 = vmul.f32 %v847, %v622
        %v882 = vmul.f32 %v851, %v623
        %v883 = vmul.f32 %v851, %v624
        %v884 = vmul.f32 %v855, %v625
        %v885 = vmul.f32 %v855, %v626
        %v886 = vmul.f32 %v859, %v627
        %v887 = vmul.f32 %v859, %v628
        %v888 = vmul.f32 %v863, %v629
        %v889 = vmul.f32 %v863, %v630
        %v890 = vmul.f32 %v867, %v631
        %v891 = vmul.f32 %v867, %v632
        %892 = vadd.xlane.f32.xlu0 %v876
        %v893 = vpop.xlane.xlu0 %892
        %894 = vadd.xlane.f32.xlu0 %v877
        %v895 = vpop.xlane.xlu0 %894
        %896 = vadd.xlane.f32.xlu0 %v878
        %v897 = vpop.xlane.xlu0 %896
        %898 = vadd.xlane.f32.xlu0 %v879
        %v899 = vpop.xlane.xlu0 %898
        %900 = vadd.xlane.f32.xlu0 %v880
        %v901 = vpop.xlane.xlu0 %900
        %902 = vadd.xlane.f32.xlu0 %v881
        %v903 = vpop.xlane.xlu0 %902
        %904 = vadd.xlane.f32.xlu0 %v882
        %v905 = vpop.xlane.xlu0 %904
        %906 = vadd.xlane.f32.xlu0 %v883
        %v907 = vpop.xlane.xlu0 %906
        %908 = vadd.xlane.f32.xlu0 %v884
        %v909 = vpop.xlane.xlu0 %908
        %910 = vadd.xlane.f32.xlu0 %v885
        %v911 = vpop.xlane.xlu0 %910
        %912 = vadd.xlane.f32.xlu0 %v886
        %v913 = vpop.xlane.xlu0 %912
        %914 = vadd.xlane.f32.xlu0 %v887
        %v915 = vpop.xlane.xlu0 %914
        %916 = vadd.xlane.f32.xlu0 %v888
        %v917 = vpop.xlane.xlu0 %916
        %918 = vadd.xlane.f32.xlu0 %v889
        %v919 = vpop.xlane.xlu0 %918
        %920 = vadd.xlane.f32.xlu0 %v890
        %v921 = vpop.xlane.xlu0 %920
        %922 = vadd.xlane.f32.xlu0 %v891
        %v923 = vpop.xlane.xlu0 %922
        %v924 = vsub.f32 1.0, %v633
        %v925 = vmul.f32 %v924, -10000.0
        %v927 = vlaneseq
        %v928 = vshrl.u32 %v927, 7
        %v929 = vsub.s32 0, %v928
        %v930 = vrot.slane %v925, %v929
        %932 = vbcast.lane.b32.xlu0 %v930, 256
        %v933 = vpop.permute.xlu0 %932
        %s935 = sor.u32 256, 8
        %936 = vbcast.lane.b32.xlu0 %v930, %s935
        %v937 = vpop.permute.xlu0 %936
        %v938 = vlaneseq
        %v939 = vshrl.u32 %v938, 7
        %v940 = vsub.s32 1, %v939
        %v941 = vrot.slane %v925, %v940
        %943 = vbcast.lane.b32.xlu0 %v941, 256
        %v944 = vpop.permute.xlu0 %943
        %s946 = sor.u32 256, 8
        %947 = vbcast.lane.b32.xlu0 %v941, %s946
        %v948 = vpop.permute.xlu0 %947
        %v949 = vlaneseq
        %v950 = vshrl.u32 %v949, 7
        %v951 = vsub.s32 2, %v950
        %v952 = vrot.slane %v925, %v951
        %954 = vbcast.lane.b32.xlu0 %v952, 256
        %v955 = vpop.permute.xlu0 %954
        %s957 = sor.u32 256, 8
        %958 = vbcast.lane.b32.xlu0 %v952, %s957
        %v959 = vpop.permute.xlu0 %958
        %v960 = vlaneseq
        %v961 = vshrl.u32 %v960, 7
        %v962 = vsub.s32 3, %v961
        %v963 = vrot.slane %v925, %v962
        %965 = vbcast.lane.b32.xlu0 %v963, 256
        %v966 = vpop.permute.xlu0 %965
        %s968 = sor.u32 256, 8
        %969 = vbcast.lane.b32.xlu0 %v963, %s968
        %v970 = vpop.permute.xlu0 %969
        %v971 = vlaneseq
        %v972 = vshrl.u32 %v971, 7
        %v973 = vsub.s32 4, %v972
        %v974 = vrot.slane %v925, %v973
        %976 = vbcast.lane.b32.xlu0 %v974, 256
        %v977 = vpop.permute.xlu0 %976
        %s979 = sor.u32 256, 8
        %980 = vbcast.lane.b32.xlu0 %v974, %s979
        %v981 = vpop.permute.xlu0 %980
        %v982 = vlaneseq
        %v983 = vshrl.u32 %v982, 7
        %v984 = vsub.s32 5, %v983
        %v985 = vrot.slane %v925, %v984
        %987 = vbcast.lane.b32.xlu0 %v985, 256
        %v988 = vpop.permute.xlu0 %987
        %s990 = sor.u32 256, 8
        %991 = vbcast.lane.b32.xlu0 %v985, %s990
        %v992 = vpop.permute.xlu0 %991
        %v993 = vlaneseq
        %v994 = vshrl.u32 %v993, 7
        %v995 = vsub.s32 6, %v994
        %v996 = vrot.slane %v925, %v995
        %998 = vbcast.lane.b32.xlu0 %v996, 256
        %v999 = vpop.permute.xlu0 %998
        %s1001 = sor.u32 256, 8
        %1002 = vbcast.lane.b32.xlu0 %v996, %s1001
        %v1003 = vpop.permute.xlu0 %1002
        %v1004 = vlaneseq
        %v1005 = vshrl.u32 %v1004, 7
        %v1006 = vsub.s32 7, %v1005
        %v1007 = vrot.slane %v925, %v1006
        %1009 = vbcast.lane.b32.xlu0 %v1007, 256
        %v1010 = vpop.permute.xlu0 %1009
        %s1012 = sor.u32 256, 8
        %1013 = vbcast.lane.b32.xlu0 %v1007, %s1012
        %v1014 = vpop.permute.xlu0 %1013
        %v1031 = vadd.f32 %v893, %v933
        %v1032 = vadd.f32 %v895, %v937
        %v1033 = vadd.f32 %v897, %v944
        %v1034 = vadd.f32 %v899, %v948
        %v1035 = vadd.f32 %v901, %v955
        %v1036 = vadd.f32 %v903, %v959
        %v1037 = vadd.f32 %v905, %v966
        %v1038 = vadd.f32 %v907, %v970
        %v1039 = vadd.f32 %v909, %v977
        %v1040 = vadd.f32 %v911, %v981
        %v1041 = vadd.f32 %v913, %v988
        %v1042 = vadd.f32 %v915, %v992
        %v1043 = vadd.f32 %v917, %v999
        %v1044 = vadd.f32 %v919, %v1003
        %v1045 = vadd.f32 %v921, %v1010
        %v1046 = vadd.f32 %v923, %v1014
        %1063 = vset.pattern.permute.xlu0 0
        %1064 = vperm.xlu0 %1063, %v1031
        %v1065 = vpop.permute.xlu0 %1064
        %1066 = vset.pattern.permute.xlu0 0
        %1067 = vperm.xlu0 %1066, %v1032
        %v1068 = vpop.permute.xlu0 %1067
        %1069 = vset.pattern.permute.xlu0 0
        %1070 = vperm.xlu0 %1069, %v1033
        %v1071 = vpop.permute.xlu0 %1070
        %1072 = vset.pattern.permute.xlu0 0
        %1073 = vperm.xlu0 %1072, %v1034
        %v1074 = vpop.permute.xlu0 %1073
        %1075 = vset.pattern.permute.xlu0 0
        %1076 = vperm.xlu0 %1075, %v1035
        %v1077 = vpop.permute.xlu0 %1076
        %1078 = vset.pattern.permute.xlu0 0
        %1079 = vperm.xlu0 %1078, %v1036
        %v1080 = vpop.permute.xlu0 %1079
        %1081 = vset.pattern.permute.xlu0 0
        %1082 = vperm.xlu0 %1081, %v1037
        %v1083 = vpop.permute.xlu0 %1082
        %1084 = vset.pattern.permute.xlu0 0
        %1085 = vperm.xlu0 %1084, %v1038
        %v1086 = vpop.permute.xlu0 %1085
        %1087 = vset.pattern.permute.xlu0 0
        %1088 = vperm.xlu0 %1087, %v1039
        %v1089 = vpop.permute.xlu0 %1088
        %1090 = vset.pattern.permute.xlu0 0
        %1091 = vperm.xlu0 %1090, %v1040
        %v1092 = vpop.permute.xlu0 %1091
        %1093 = vset.pattern.permute.xlu0 0
        %1094 = vperm.xlu0 %1093, %v1041
        %v1095 = vpop.permute.xlu0 %1094
        %1096 = vset.pattern.permute.xlu0 0
        %1097 = vperm.xlu0 %1096, %v1042
        %v1098 = vpop.permute.xlu0 %1097
        %1099 = vset.pattern.permute.xlu0 0
        %1100 = vperm.xlu0 %1099, %v1043
        %v1101 = vpop.permute.xlu0 %1100
        %1102 = vset.pattern.permute.xlu0 0
        %1103 = vperm.xlu0 %1102, %v1044
        %v1104 = vpop.permute.xlu0 %1103
        %1105 = vset.pattern.permute.xlu0 0
        %1106 = vperm.xlu0 %1105, %v1045
        %v1107 = vpop.permute.xlu0 %1106
        %1108 = vset.pattern.permute.xlu0 0
        %1109 = vperm.xlu0 %1108, %v1046
        %v1110 = vpop.permute.xlu0 %1109
        %v1111 = vlaneseq
        %v1112 = vand.u32 %v1111, 127
        %v1113 = vlaneseq
        %v1114 = vshrl.u32 %v1113, 7
        %v1115 = vsub.s32 %v1112, %v1114
        %v1116 = vrot.slane %v1065, %v1115
        %v1117 = vadd.s32 %v1112, 4294967288
        %v1118 = vlaneseq
        %v1119 = vshrl.u32 %v1118, 7
        %v1120 = vsub.s32 %v1117, %v1119
        %v1121 = vrot.slane %v1068, %v1120
        %vm1122 = vcmask 130112
        %v1123 = vsel %vm1122, %v1121, %v1116
        %v1124 = vlaneseq
        %v1125 = vshrl.u32 %v1124, 7
        %v1126 = vsub.s32 %v1112, %v1125
        %v1127 = vrot.slane %v1071, %v1126
        %v1128 = vlaneseq
        %v1129 = vshrl.u32 %v1128, 7
        %v1130 = vsub.s32 %v1117, %v1129
        %v1131 = vrot.slane %v1074, %v1130
        %v1132 = vsel %vm1122, %v1131, %v1127
        %v1133 = vlaneseq
        %v1134 = vshrl.u32 %v1133, 7
        %v1135 = vsub.s32 %v1112, %v1134
        %v1136 = vrot.slane %v1077, %v1135
        %v1137 = vlaneseq
        %v1138 = vshrl.u32 %v1137, 7
        %v1139 = vsub.s32 %v1117, %v1138
        %v1140 = vrot.slane %v1080, %v1139
        %v1141 = vsel %vm1122, %v1140, %v1136
        %v1142 = vlaneseq
        %v1143 = vshrl.u32 %v1142, 7
        %v1144 = vsub.s32 %v1112, %v1143
        %v1145 = vrot.slane %v1083, %v1144
        %v1146 = vlaneseq
        %v1147 = vshrl.u32 %v1146, 7
        %v1148 = vsub.s32 %v1117, %v1147
        %v1149 = vrot.slane %v1086, %v1148
        %v1150 = vsel %vm1122, %v1149, %v1145
        %v1151 = vlaneseq
        %v1152 = vshrl.u32 %v1151, 7
        %v1153 = vsub.s32 %v1112, %v1152
        %v1154 = vrot.slane %v1089, %v1153
        %v1155 = vlaneseq
        %v1156 = vshrl.u32 %v1155, 7
        %v1157 = vsub.s32 %v1117, %v1156
        %v1158 = vrot.slane %v1092, %v1157
        %v1159 = vsel %vm1122, %v1158, %v1154
        %v1160 = vlaneseq
        %v1161 = vshrl.u32 %v1160, 7
        %v1162 = vsub.s32 %v1112, %v1161
        %v1163 = vrot.slane %v1095, %v1162
        %v1164 = vlaneseq
        %v1165 = vshrl.u32 %v1164, 7
        %v1166 = vsub.s32 %v1117, %v1165
        %v1167 = vrot.slane %v1098, %v1166
        %v1168 = vsel %vm1122, %v1167, %v1163
        %v1169 = vlaneseq
        %v1170 = vshrl.u32 %v1169, 7
        %v1171 = vsub.s32 %v1112, %v1170
        %v1172 = vrot.slane %v1101, %v1171
        %v1173 = vlaneseq
        %v1174 = vshrl.u32 %v1173, 7
        %v1175 = vsub.s32 %v1117, %v1174
        %v1176 = vrot.slane %v1104, %v1175
        %v1177 = vsel %vm1122, %v1176, %v1172
        %v1178 = vlaneseq
        %v1179 = vshrl.u32 %v1178, 7
        %v1180 = vsub.s32 %v1112, %v1179
        %v1181 = vrot.slane %v1107, %v1180
        %v1182 = vlaneseq
        %v1183 = vshrl.u32 %v1182, 7
        %v1184 = vsub.s32 %v1117, %v1183
        %v1185 = vrot.slane %v1110, %v1184
        %v1186 = vsel %vm1122, %v1185, %v1181
        %vm1187 = vcmask 1041409
        %v1188 = vsel %vm1187, %v1132, %v1123
        %vm1189 = vcmask 1042434
        %v1190 = vsel %vm1189, %v1141, %v1188
        %vm1191 = vcmask 1043459
        %v1192 = vsel %vm1191, %v1150, %v1190
        %vm1193 = vcmask 1044484
        %v1194 = vsel %vm1193, %v1159, %v1192
        %vm1195 = vcmask 1045509
        %v1196 = vsel %vm1195, %v1168, %v1194
        %vm1197 = vcmask 1046534
        %v1198 = vsel %vm1197, %v1177, %v1196
        %vm1199 = vcmask 1047559
        %v1200 = vsel %vm1199, %v1186, %v1198
        %vm1202 = vcmask 130048
        %v1203 = vsel %vm1202, %v1200, -inf
        %1204 = vmax.xlane.f32.xlu0 %v1203
        %v1205 = vpop.xlane.xlu0 %1204
        %v1207 = vlaneseq
        %v1208 = vshrl.u32 %v1207, 7
        %v1209 = vsub.s32 0, %v1208
        %v1210 = vrot.slane %v1205, %v1209
        %v1211 = vlaneseq
        %v1212 = vshrl.u32 %v1211, 7
        %v1213 = vsub.s32 1, %v1212
        %v1214 = vrot.slane %v1205, %v1213
        %v1215 = vlaneseq
        %v1216 = vshrl.u32 %v1215, 7
        %v1217 = vsub.s32 2, %v1216
        %v1218 = vrot.slane %v1205, %v1217
        %v1219 = vlaneseq
        %v1220 = vshrl.u32 %v1219, 7
        %v1221 = vsub.s32 3, %v1220
        %v1222 = vrot.slane %v1205, %v1221
        %v1223 = vlaneseq
        %v1224 = vshrl.u32 %v1223, 7
        %v1225 = vsub.s32 4, %v1224
        %v1226 = vrot.slane %v1205, %v1225
        %v1227 = vlaneseq
        %v1228 = vshrl.u32 %v1227, 7
        %v1229 = vsub.s32 5, %v1228
        %v1230 = vrot.slane %v1205, %v1229
        %v1231 = vlaneseq
        %v1232 = vshrl.u32 %v1231, 7
        %v1233 = vsub.s32 6, %v1232
        %v1234 = vrot.slane %v1205, %v1233
        %v1235 = vlaneseq
        %v1236 = vshrl.u32 %v1235, 7
        %v1237 = vsub.s32 7, %v1236
        %v1238 = vrot.slane %v1205, %v1237
        %v1247 = vsub.f32 %v1031, %v1210
        %v1248 = vsub.f32 %v1032, %v1210
        %v1249 = vsub.f32 %v1033, %v1214
        %v1250 = vsub.f32 %v1034, %v1214
        %v1251 = vsub.f32 %v1035, %v1218
        %v1252 = vsub.f32 %v1036, %v1218
        %v1253 = vsub.f32 %v1037, %v1222
        %v1254 = vsub.f32 %v1038, %v1222
        %v1255 = vsub.f32 %v1039, %v1226
        %v1256 = vsub.f32 %v1040, %v1226
        %v1257 = vsub.f32 %v1041, %v1230
        %v1258 = vsub.f32 %v1042, %v1230
        %v1259 = vsub.f32 %v1043, %v1234
        %v1260 = vsub.f32 %v1044, %v1234
        %v1261 = vsub.f32 %v1045, %v1238
        %v1262 = vsub.f32 %v1046, %v1238
        %v1263 = vmul.f32 %v1247, 1.442695
        %v1264 = vpow.pop %v1263
        %v1265 = vmul.f32 %v1248, 1.442695
        %v1266 = vpow.pop %v1265
        %v1267 = vmul.f32 %v1249, 1.442695
        %v1268 = vpow.pop %v1267
        %v1269 = vmul.f32 %v1250, 1.442695
        %v1270 = vpow.pop %v1269
        %v1271 = vmul.f32 %v1251, 1.442695
        %v1272 = vpow.pop %v1271
        %v1273 = vmul.f32 %v1252, 1.442695
        %v1274 = vpow.pop %v1273
        %v1275 = vmul.f32 %v1253, 1.442695
        %v1276 = vpow.pop %v1275
        %v1277 = vmul.f32 %v1254, 1.442695
        %v1278 = vpow.pop %v1277
        %v1279 = vmul.f32 %v1255, 1.442695
        %v1280 = vpow.pop %v1279
        %v1281 = vmul.f32 %v1256, 1.442695
        %v1282 = vpow.pop %v1281
        %v1283 = vmul.f32 %v1257, 1.442695
        %v1284 = vpow.pop %v1283
        %v1285 = vmul.f32 %v1258, 1.442695
        %v1286 = vpow.pop %v1285
        %v1287 = vmul.f32 %v1259, 1.442695
        %v1288 = vpow.pop %v1287
        %v1289 = vmul.f32 %v1260, 1.442695
        %v1290 = vpow.pop %v1289
        %v1291 = vmul.f32 %v1261, 1.442695
        %v1292 = vpow.pop %v1291
        %v1293 = vmul.f32 %v1262, 1.442695
        %v1294 = vpow.pop %v1293
        %1311 = vset.pattern.permute.xlu0 0
        %1312 = vperm.xlu0 %1311, %v1264
        %v1313 = vpop.permute.xlu0 %1312
        %1314 = vset.pattern.permute.xlu0 0
        %1315 = vperm.xlu0 %1314, %v1266
        %v1316 = vpop.permute.xlu0 %1315
        %1317 = vset.pattern.permute.xlu0 0
        %1318 = vperm.xlu0 %1317, %v1268
        %v1319 = vpop.permute.xlu0 %1318
        %1320 = vset.pattern.permute.xlu0 0
        %1321 = vperm.xlu0 %1320, %v1270
        %v1322 = vpop.permute.xlu0 %1321
        %1323 = vset.pattern.permute.xlu0 0
        %1324 = vperm.xlu0 %1323, %v1272
        %v1325 = vpop.permute.xlu0 %1324
        %1326 = vset.pattern.permute.xlu0 0
        %1327 = vperm.xlu0 %1326, %v1274
        %v1328 = vpop.permute.xlu0 %1327
        %1329 = vset.pattern.permute.xlu0 0
        %1330 = vperm.xlu0 %1329, %v1276
        %v1331 = vpop.permute.xlu0 %1330
        %1332 = vset.pattern.permute.xlu0 0
        %1333 = vperm.xlu0 %1332, %v1278
        %v1334 = vpop.permute.xlu0 %1333
        %1335 = vset.pattern.permute.xlu0 0
        %1336 = vperm.xlu0 %1335, %v1280
        %v1337 = vpop.permute.xlu0 %1336
        %1338 = vset.pattern.permute.xlu0 0
        %1339 = vperm.xlu0 %1338, %v1282
        %v1340 = vpop.permute.xlu0 %1339
        %1341 = vset.pattern.permute.xlu0 0
        %1342 = vperm.xlu0 %1341, %v1284
        %v1343 = vpop.permute.xlu0 %1342
        %1344 = vset.pattern.permute.xlu0 0
        %1345 = vperm.xlu0 %1344, %v1286
        %v1346 = vpop.permute.xlu0 %1345
        %1347 = vset.pattern.permute.xlu0 0
        %1348 = vperm.xlu0 %1347, %v1288
        %v1349 = vpop.permute.xlu0 %1348
        %1350 = vset.pattern.permute.xlu0 0
        %1351 = vperm.xlu0 %1350, %v1290
        %v1352 = vpop.permute.xlu0 %1351
        %1353 = vset.pattern.permute.xlu0 0
        %1354 = vperm.xlu0 %1353, %v1292
        %v1355 = vpop.permute.xlu0 %1354
        %1356 = vset.pattern.permute.xlu0 0
        %1357 = vperm.xlu0 %1356, %v1294
        %v1358 = vpop.permute.xlu0 %1357
        %v1359 = vlaneseq
        %v1360 = vshrl.u32 %v1359, 7
        %v1361 = vsub.s32 %v1112, %v1360
        %v1362 = vrot.slane %v1313, %v1361
        %v1363 = vlaneseq
        %v1364 = vshrl.u32 %v1363, 7
        %v1365 = vsub.s32 %v1117, %v1364
        %v1366 = vrot.slane %v1316, %v1365
        %v1367 = vsel %vm1122, %v1366, %v1362
        %v1368 = vlaneseq
        %v1369 = vshrl.u32 %v1368, 7
        %v1370 = vsub.s32 %v1112, %v1369
        %v1371 = vrot.slane %v1319, %v1370
        %v1372 = vlaneseq
        %v1373 = vshrl.u32 %v1372, 7
        %v1374 = vsub.s32 %v1117, %v1373
        %v1375 = vrot.slane %v1322, %v1374
        %v1376 = vsel %vm1122, %v1375, %v1371
        %v1377 = vlaneseq
        %v1378 = vshrl.u32 %v1377, 7
        %v1379 = vsub.s32 %v1112, %v1378
        %v1380 = vrot.slane %v1325, %v1379
        %v1381 = vlaneseq
        %v1382 = vshrl.u32 %v1381, 7
        %v1383 = vsub.s32 %v1117, %v1382
        %v1384 = vrot.slane %v1328, %v1383
        %v1385 = vsel %vm1122, %v1384, %v1380
        %v1386 = vlaneseq
        %v1387 = vshrl.u32 %v1386, 7
        %v1388 = vsub.s32 %v1112, %v1387
        %v1389 = vrot.slane %v1331, %v1388
        %v1390 = vlaneseq
        %v1391 = vshrl.u32 %v1390, 7
        %v1392 = vsub.s32 %v1117, %v1391
        %v1393 = vrot.slane %v1334, %v1392
        %v1394 = vsel %vm1122, %v1393, %v1389
        %v1395 = vlaneseq
        %v1396 = vshrl.u32 %v1395, 7
        %v1397 = vsub.s32 %v1112, %v1396
        %v1398 = vrot.slane %v1337, %v1397
        %v1399 = vlaneseq
        %v1400 = vshrl.u32 %v1399, 7
        %v1401 = vsub.s32 %v1117, %v1400
        %v1402 = vrot.slane %v1340, %v1401
        %v1403 = vsel %vm1122, %v1402, %v1398
        %v1404 = vlaneseq
        %v1405 = vshrl.u32 %v1404, 7
        %v1406 = vsub.s32 %v1112, %v1405
        %v1407 = vrot.slane %v1343, %v1406
        %v1408 = vlaneseq
        %v1409 = vshrl.u32 %v1408, 7
        %v1410 = vsub.s32 %v1117, %v1409
        %v1411 = vrot.slane %v1346, %v1410
        %v1412 = vsel %vm1122, %v1411, %v1407
        %v1413 = vlaneseq
        %v1414 = vshrl.u32 %v1413, 7
        %v1415 = vsub.s32 %v1112, %v1414
        %v1416 = vrot.slane %v1349, %v1415
        %v1417 = vlaneseq
        %v1418 = vshrl.u32 %v1417, 7
        %v1419 = vsub.s32 %v1117, %v1418
        %v1420 = vrot.slane %v1352, %v1419
        %v1421 = vsel %vm1122, %v1420, %v1416
        %v1422 = vlaneseq
        %v1423 = vshrl.u32 %v1422, 7
        %v1424 = vsub.s32 %v1112, %v1423
        %v1425 = vrot.slane %v1355, %v1424
        %v1426 = vlaneseq
        %v1427 = vshrl.u32 %v1426, 7
        %v1428 = vsub.s32 %v1117, %v1427
        %v1429 = vrot.slane %v1358, %v1428
        %v1430 = vsel %vm1122, %v1429, %v1425
        %v1431 = vsel %vm1187, %v1376, %v1367
        %v1432 = vsel %vm1189, %v1385, %v1431
        %v1433 = vsel %vm1191, %v1394, %v1432
        %v1434 = vsel %vm1193, %v1403, %v1433
        %v1435 = vsel %vm1195, %v1412, %v1434
        %v1436 = vsel %vm1197, %v1421, %v1435
        %v1437 = vsel %vm1199, %v1430, %v1436
        %v1439 = vsel %vm1202, %v1437, 0.0
        %1440 = vadd.xlane.f32.xlu0 %v1439
        %v1441 = vpop.xlane.xlu0 %1440
        %v1442 = vrcp.pop %v1441
        %v1444 = vlaneseq
        %v1445 = vshrl.u32 %v1444, 7
        %v1446 = vsub.s32 0, %v1445
        %v1447 = vrot.slane %v1442, %v1446
        %v1448 = vlaneseq
        %v1449 = vshrl.u32 %v1448, 7
        %v1450 = vsub.s32 1, %v1449
        %v1451 = vrot.slane %v1442, %v1450
        %v1452 = vlaneseq
        %v1453 = vshrl.u32 %v1452, 7
        %v1454 = vsub.s32 2, %v1453
        %v1455 = vrot.slane %v1442, %v1454
        %v1456 = vlaneseq
        %v1457 = vshrl.u32 %v1456, 7
        %v1458 = vsub.s32 3, %v1457
        %v1459 = vrot.slane %v1442, %v1458
        %v1460 = vlaneseq
        %v1461 = vshrl.u32 %v1460, 7
        %v1462 = vsub.s32 4, %v1461
        %v1463 = vrot.slane %v1442, %v1462
        %v1464 = vlaneseq
        %v1465 = vshrl.u32 %v1464, 7
        %v1466 = vsub.s32 5, %v1465
        %v1467 = vrot.slane %v1442, %v1466
        %v1468 = vlaneseq
        %v1469 = vshrl.u32 %v1468, 7
        %v1470 = vsub.s32 6, %v1469
        %v1471 = vrot.slane %v1442, %v1470
        %v1472 = vlaneseq
        %v1473 = vshrl.u32 %v1472, 7
        %v1474 = vsub.s32 7, %v1473
        %v1475 = vrot.slane %v1442, %v1474
        %v1484 = vmul.f32 %v1264, %v1447
        %v1485 = vmul.f32 %v1266, %v1447
        %v1486 = vmul.f32 %v1268, %v1451
        %v1487 = vmul.f32 %v1270, %v1451
        %v1488 = vmul.f32 %v1272, %v1455
        %v1489 = vmul.f32 %v1274, %v1455
        %v1490 = vmul.f32 %v1276, %v1459
        %v1491 = vmul.f32 %v1278, %v1459
        %v1492 = vmul.f32 %v1280, %v1463
        %v1493 = vmul.f32 %v1282, %v1463
        %v1494 = vmul.f32 %v1284, %v1467
        %v1495 = vmul.f32 %v1286, %v1467
        %v1496 = vmul.f32 %v1288, %v1471
        %v1497 = vmul.f32 %v1290, %v1471
        %v1498 = vmul.f32 %v1292, %v1475
        %v1499 = vmul.f32 %v1294, %v1475
        %1501 = vset.pattern.permute.xlu0 0
        %1502 = vperm.xlu0 %1501, %v1484
        %v1503 = vpop.permute.xlu0 %1502
        %1506 = vset.pattern.permute.xlu0 0
        %1507 = vperm.xlu0 %1506, %v1485
        %v1508 = vpop.permute.xlu0 %1507
        %1511 = vset.pattern.permute.xlu0 0
        %1512 = vperm.xlu0 %1511, %v1486
        %v1513 = vpop.permute.xlu0 %1512
        %1516 = vset.pattern.permute.xlu0 0
        %1517 = vperm.xlu0 %1516, %v1487
        %v1518 = vpop.permute.xlu0 %1517
        %1521 = vset.pattern.permute.xlu0 0
        %1522 = vperm.xlu0 %1521, %v1488
        %v1523 = vpop.permute.xlu0 %1522
        %1526 = vset.pattern.permute.xlu0 0
        %1527 = vperm.xlu0 %1526, %v1489
        %v1528 = vpop.permute.xlu0 %1527
        %1531 = vset.pattern.permute.xlu0 0
        %1532 = vperm.xlu0 %1531, %v1490
        %v1533 = vpop.permute.xlu0 %1532
        %1536 = vset.pattern.permute.xlu0 0
        %1537 = vperm.xlu0 %1536, %v1491
        %v1538 = vpop.permute.xlu0 %1537
        %1541 = vset.pattern.permute.xlu0 0
        %1542 = vperm.xlu0 %1541, %v1492
        %v1543 = vpop.permute.xlu0 %1542
        %1546 = vset.pattern.permute.xlu0 0
        %1547 = vperm.xlu0 %1546, %v1493
        %v1548 = vpop.permute.xlu0 %1547
        %1551 = vset.pattern.permute.xlu0 0
        %1552 = vperm.xlu0 %1551, %v1494
        %v1553 = vpop.permute.xlu0 %1552
        %1556 = vset.pattern.permute.xlu0 0
        %1557 = vperm.xlu0 %1556, %v1495
        %v1558 = vpop.permute.xlu0 %1557
        %1561 = vset.pattern.permute.xlu0 0
        %1562 = vperm.xlu0 %1561, %v1496
        %v1563 = vpop.permute.xlu0 %1562
        %1566 = vset.pattern.permute.xlu0 0
        %1567 = vperm.xlu0 %1566, %v1497
        %v1568 = vpop.permute.xlu0 %1567
        %1571 = vset.pattern.permute.xlu0 0
        %1572 = vperm.xlu0 %1571, %v1498
        %v1573 = vpop.permute.xlu0 %1572
        %1576 = vset.pattern.permute.xlu0 0
        %1577 = vperm.xlu0 %1576, %v1499
        %v1578 = vpop.permute.xlu0 %1577
        %v1580 = vmul.f32 %v1503, %v617
        %v1581 = vmul.f32 %v1508, %v618
        %v1582 = vmul.f32 %v1513, %v619
        %v1583 = vmul.f32 %v1518, %v620
        %v1584 = vmul.f32 %v1523, %v621
        %v1585 = vmul.f32 %v1528, %v622
        %v1586 = vmul.f32 %v1533, %v623
        %v1587 = vmul.f32 %v1538, %v624
        %v1588 = vmul.f32 %v1543, %v625
        %v1589 = vmul.f32 %v1548, %v626
        %v1590 = vmul.f32 %v1553, %v627
        %v1591 = vmul.f32 %v1558, %v628
        %v1592 = vmul.f32 %v1563, %v629
        %v1593 = vmul.f32 %v1568, %v630
        %v1594 = vmul.f32 %v1573, %v631
        %v1595 = vmul.f32 %v1578, %v632
        %v1596 = vadd.f32 %v1580, %v1581
        %v1597 = vrot.slane %v1596, 4
        %v1598 = vadd.f32 %v1596, %v1597
        %v1599 = vrot.slane %v1598, 2
        %v1600 = vadd.f32 %v1598, %v1599
        %v1601 = vrot.slane %v1600, 1
        %v1602 = vadd.f32 %v1600, %v1601
        %v1603 = vadd.f32 %v1582, %v1583
        %v1604 = vrot.slane %v1603, 4
        %v1605 = vadd.f32 %v1603, %v1604
        %v1606 = vrot.slane %v1605, 2
        %v1607 = vadd.f32 %v1605, %v1606
        %v1608 = vrot.slane %v1607, 1
        %v1609 = vadd.f32 %v1607, %v1608
        %v1610 = vadd.f32 %v1584, %v1585
        %v1611 = vrot.slane %v1610, 4
        %v1612 = vadd.f32 %v1610, %v1611
        %v1613 = vrot.slane %v1612, 2
        %v1614 = vadd.f32 %v1612, %v1613
        %v1615 = vrot.slane %v1614, 1
        %v1616 = vadd.f32 %v1614, %v1615
        %v1617 = vadd.f32 %v1586, %v1587
        %v1618 = vrot.slane %v1617, 4
        %v1619 = vadd.f32 %v1617, %v1618
        %v1620 = vrot.slane %v1619, 2
        %v1621 = vadd.f32 %v1619, %v1620
        %v1622 = vrot.slane %v1621, 1
        %v1623 = vadd.f32 %v1621, %v1622
        %v1624 = vadd.f32 %v1588, %v1589
        %v1625 = vrot.slane %v1624, 4
        %v1626 = vadd.f32 %v1624, %v1625
        %v1627 = vrot.slane %v1626, 2
        %v1628 = vadd.f32 %v1626, %v1627
        %v1629 = vrot.slane %v1628, 1
        %v1630 = vadd.f32 %v1628, %v1629
        %v1631 = vadd.f32 %v1590, %v1591
        %v1632 = vrot.slane %v1631, 4
        %v1633 = vadd.f32 %v1631, %v1632
        %v1634 = vrot.slane %v1633, 2
        %v1635 = vadd.f32 %v1633, %v1634
        %v1636 = vrot.slane %v1635, 1
        %v1637 = vadd.f32 %v1635, %v1636
        %v1638 = vadd.f32 %v1592, %v1593
        %v1639 = vrot.slane %v1638, 4
        %v1640 = vadd.f32 %v1638, %v1639
        %v1641 = vrot.slane %v1640, 2
        %v1642 = vadd.f32 %v1640, %v1641
        %v1643 = vrot.slane %v1642, 1
        %v1644 = vadd.f32 %v1642, %v1643
        %v1645 = vadd.f32 %v1594, %v1595
        %v1646 = vrot.slane %v1645, 4
        %v1647 = vadd.f32 %v1645, %v1646
        %v1648 = vrot.slane %v1647, 2
        %v1649 = vadd.f32 %v1647, %v1648
        %v1650 = vrot.slane %v1649, 1
        %v1651 = vadd.f32 %v1649, %v1650
        %v1652 = vld [vmem:[#allocation10] sm:$0xff]
        %v1653 = vld [vmem:[#allocation10 + $0x8] sm:$0xff]
        %v1654 = vld [vmem:[#allocation10 + $0x10] sm:$0xff]
        %v1655 = vld [vmem:[#allocation10 + $0x18] sm:$0xff]
        %v1656 = vld [vmem:[#allocation10 + $0x20] sm:$0xff]
        %v1657 = vld [vmem:[#allocation10 + $0x28] sm:$0xff]
        %v1658 = vld [vmem:[#allocation10 + $0x30] sm:$0xff]
        %v1659 = vld [vmem:[#allocation10 + $0x38] sm:$0xff]
        %v1660 = vld [vmem:[#allocation10 + $0x40] sm:$0xff]
        %v1661 = vld [vmem:[#allocation10 + $0x48] sm:$0xff]
        %v1662 = vld [vmem:[#allocation10 + $0x50] sm:$0xff]
        %v1663 = vld [vmem:[#allocation10 + $0x58] sm:$0xff]
        %v1664 = vld [vmem:[#allocation10 + $0x60] sm:$0xff]
        %v1665 = vld [vmem:[#allocation10 + $0x68] sm:$0xff]
        %v1666 = vld [vmem:[#allocation10 + $0x70] sm:$0xff]
        %v1667 = vld [vmem:[#allocation10 + $0x78] sm:$0xff]
        %v1668 = vld [vmem:[%s5] sm:$0x1]
        %v1670 = vlaneseq
        %v1671 = vshrl.u32 %v1670, 7
        %v1672 = vsub.s32 0, %v1671
        %v1673 = vrot.slane %v1668, %v1672
        %v1683 = vsel %vm1187, %v1609, %v1602
        %v1684 = vsel %vm1189, %v1616, %v1683
        %v1685 = vsel %vm1191, %v1623, %v1684
        %v1686 = vsel %vm1193, %v1630, %v1685
        %v1687 = vsel %vm1195, %v1637, %v1686
        %v1688 = vsel %vm1197, %v1644, %v1687
        %v1689 = vsel %vm1199, %v1651, %v1688
        %1691 = vmatprep.subr.mxu0 0.0
        %1692 = vmatpush1.msra.mxu0 %v1652
        %1693 = vmatprep.subr.mxu0 0.0
        %1694 = vmatpush1.msra.mxu0 %v1653
        %1695 = vmatprep.subr.mxu0 0.0
        %1696 = vmatpush1.msra.mxu0 %v1654
        %1697 = vmatprep.subr.mxu0 0.0
        %1698 = vmatpush1.msra.mxu0 %v1655
        %1699 = vmatprep.subr.mxu0 0.0
        %1700 = vmatpush1.msra.mxu0 %v1656
        %1701 = vmatprep.subr.mxu0 0.0
        %1702 = vmatpush1.msra.mxu0 %v1657
        %1703 = vmatprep.subr.mxu0 0.0
        %1704 = vmatpush1.msra.mxu0 %v1658
        %1705 = vmatprep.subr.mxu0 0.0
        %1706 = vmatpush1.msra.mxu0 %v1659
        %1707 = vmatprep.subr.mxu0 0.0
        %1708 = vmatpush1.msra.mxu0 %v1660
        %1709 = vmatprep.subr.mxu0 0.0
        %1710 = vmatpush1.msra.mxu0 %v1661
        %1711 = vmatprep.subr.mxu0 0.0
        %1712 = vmatpush1.msra.mxu0 %v1662
        %1713 = vmatprep.subr.mxu0 0.0
        %1714 = vmatpush1.msra.mxu0 %v1663
        %1715 = vmatprep.subr.mxu0 0.0
        %1716 = vmatpush1.msra.mxu0 %v1664
        %1717 = vmatprep.subr.mxu0 0.0
        %1718 = vmatpush1.msra.mxu0 %v1665
        %1719 = vmatprep.subr.mxu0 0.0
        %1720 = vmatpush1.msra.mxu0 %v1666
        %1721 = vmatprep.subr.mxu0 0.0
        %1722 = vmatpush1.msra.mxu0 %v1667
        %1723 = vmatprep.subr.mxu0 0.0
        %1724 = vmatpush1.msra.mxu0 0.0
        %1725 = vmatprep.subr.mxu0 0.0
        %1726 = vmatpush1.msra.mxu0 0.0
        %1727 = vmatprep.subr.mxu0 0.0
        %1728 = vmatpush1.msra.mxu0 0.0
        %1729 = vmatprep.subr.mxu0 0.0
        %1730 = vmatpush1.msra.mxu0 0.0
        %1731 = vmatprep.subr.mxu0 0.0
        %1732 = vmatpush1.msra.mxu0 0.0
        %1733 = vmatprep.subr.mxu0 0.0
        %1734 = vmatpush1.msra.mxu0 0.0
        %1735 = vmatprep.subr.mxu0 0.0
        %1736 = vmatpush1.msra.mxu0 0.0
        %1737 = vmatprep.subr.mxu0 0.0
        %1738 = vmatpush1.msra.mxu0 0.0
        %1739 = vmatprep.subr.mxu0 0.0
        %1740 = vmatpush1.msra.mxu0 0.0
        %1741 = vmatprep.subr.mxu0 0.0
        %1742 = vmatpush1.msra.mxu0 0.0
        %1743 = vmatprep.subr.mxu0 0.0
        %1744 = vmatpush1.msra.mxu0 0.0
        %1745 = vmatprep.subr.mxu0 0.0
        %1746 = vmatpush1.msra.mxu0 0.0
        %1747 = vmatprep.subr.mxu0 0.0
        %1748 = vmatpush1.msra.mxu0 0.0
        %1749 = vmatprep.subr.mxu0 0.0
        %1750 = vmatpush1.msra.mxu0 0.0
        %1751 = vmatprep.subr.mxu0 0.0
        %1752 = vmatpush1.msra.mxu0 0.0
        %1753 = vmatprep.subr.mxu0 0.0
        %1754 = vmatpush1.msra.mxu0 0.0
        %1755 = vmatprep.mubr.f32.mxu0 0.0
        %1756 = vmatmul.mubr.f32.gmra.mrb[0].mxu0 %v1689
        %v1757 = vpop.f32.mrb[0].mxu0
        %v1758 = vadd.f32 %v1673, %v1757
        %v1759 = vpop.f32.mrb[0].mxu0
        %1760 = vdwg.mxu0
        %v1769 = vsel %vm1187, %v693, %v692
        %v1770 = vsel %vm1189, %v694, %v1769
        %v1771 = vsel %vm1191, %v695, %v1770
        %v1772 = vsel %vm1193, %v696, %v1771
        %v1773 = vsel %vm1195, %v697, %v1772
        %v1774 = vsel %vm1197, %v698, %v1773
        %v1775 = vsel %vm1199, %v699, %v1774
        %v1777 = vadd.f32 %v1758, %v1775
        %v1778 = vld [vmem:[%s6] sm:$0x1]
        %v1779 = vld [vmem:[%s7] sm:$0x1]
        %1780 = vadd.xlane.f32.xlu0 %v1777
        %v1781 = vpop.xlane.xlu0 %1780
        %v1782 = vrcp.pop 128.0
        %v1783 = vmul.f32 %v1781, %v1782
        %v1784 = vsub.f32 %v1777, %v1783
        %v1785 = vmul.f32 %v1784, %v1784
        %1786 = vadd.xlane.f32.xlu0 %v1785
        %v1787 = vpop.xlane.xlu0 %1786
        %v1788 = vmul.f32 %v1787, %v1782
        %v1789 = vadd.f32 %v1788, 1e-06
        %v1790 = vrsqrt.pop %v1789
        %v1791 = vmul.f32 %v1784, %v1790
        %v1793 = vlaneseq
        %v1794 = vshrl.u32 %v1793, 7
        %v1795 = vsub.s32 0, %v1794
        %v1796 = vrot.slane %v1778, %v1795
        %v1798 = vmul.f32 %v1791, %v1796
        %v1800 = vlaneseq
        %v1801 = vshrl.u32 %v1800, 7
        %v1802 = vsub.s32 0, %v1801
        %v1803 = vrot.slane %v1779, %v1802
        %v1805 = vadd.f32 %v1798, %v1803
        %v1806 = vld [vmem:[#allocation11] sm:$0xff]
        %v1807 = vld [vmem:[#allocation11 + $0x8] sm:$0xff]
        %v1808 = vld [vmem:[#allocation11 + $0x10] sm:$0xff]
        %v1809 = vld [vmem:[#allocation11 + $0x18] sm:$0xff]
        %v1810 = vld [vmem:[#allocation11 + $0x20] sm:$0xff]
        %v1811 = vld [vmem:[#allocation11 + $0x28] sm:$0xff]
        %v1812 = vld [vmem:[#allocation11 + $0x30] sm:$0xff]
        %v1813 = vld [vmem:[#allocation11 + $0x38] sm:$0xff]
        %v1814 = vld [vmem:[#allocation11 + $0x40] sm:$0xff]
        %v1815 = vld [vmem:[#allocation11 + $0x48] sm:$0xff]
        %v1816 = vld [vmem:[#allocation11 + $0x50] sm:$0xff]
        %v1817 = vld [vmem:[#allocation11 + $0x58] sm:$0xff]
        %v1818 = vld [vmem:[#allocation11 + $0x60] sm:$0xff]
        %v1819 = vld [vmem:[#allocation11 + $0x68] sm:$0xff]
        %v1820 = vld [vmem:[#allocation11 + $0x70] sm:$0xff]
        %v1821 = vld [vmem:[#allocation11 + $0x78] sm:$0xff]
        %v1822 = vld [vmem:[#allocation11 + $0x80] sm:$0xff]
        %v1823 = vld [vmem:[#allocation11 + $0x88] sm:$0xff]
        %v1824 = vld [vmem:[#allocation11 + $0x90] sm:$0xff]
        %v1825 = vld [vmem:[#allocation11 + $0x98] sm:$0xff]
        %v1826 = vld [vmem:[#allocation11 + $0xa0] sm:$0xff]
        %v1827 = vld [vmem:[#allocation11 + $0xa8] sm:$0xff]
        %v1828 = vld [vmem:[#allocation11 + $0xb0] sm:$0xff]
        %v1829 = vld [vmem:[#allocation11 + $0xb8] sm:$0xff]
        %v1830 = vld [vmem:[#allocation11 + $0xc0] sm:$0xff]
        %v1831 = vld [vmem:[#allocation11 + $0xc8] sm:$0xff]
        %v1832 = vld [vmem:[#allocation11 + $0xd0] sm:$0xff]
        %v1833 = vld [vmem:[#allocation11 + $0xd8] sm:$0xff]
        %v1834 = vld [vmem:[#allocation11 + $0xe0] sm:$0xff]
        %v1835 = vld [vmem:[#allocation11 + $0xe8] sm:$0xff]
        %v1836 = vld [vmem:[#allocation11 + $0xf0] sm:$0xff]
        %v1837 = vld [vmem:[#allocation11 + $0xf8] sm:$0xff]
        %v1838 = vld [vmem:[%s9] sm:$0x3]
        %v1840 = vlaneseq
        %v1841 = vshrl.u32 %v1840, 7
        %v1842 = vsub.s32 0, %v1841
        %v1843 = vrot.slane %v1838, %v1842
        %v1844 = vlaneseq
        %v1845 = vshrl.u32 %v1844, 7
        %v1846 = vsub.s32 1, %v1845
        %v1847 = vrot.slane %v1838, %v1846
        %1850 = vmatprep.subr.mxu0 %v1807
        %1851 = vmatpush1.msra.mxu0 %v1806
        %1852 = vmatprep.subr.mxu0 %v1809
        %1853 = vmatpush1.msra.mxu0 %v1808
        %1854 = vmatprep.subr.mxu0 %v1811
        %1855 = vmatpush1.msra.mxu0 %v1810
        %1856 = vmatprep.subr.mxu0 %v1813
        %1857 = vmatpush1.msra.mxu0 %v1812
        %1858 = vmatprep.subr.mxu0 %v1815
        %1859 = vmatpush1.msra.mxu0 %v1814
        %1860 = vmatprep.subr.mxu0 %v1817
        %1861 = vmatpush1.msra.mxu0 %v1816
        %1862 = vmatprep.subr.mxu0 %v1819
        %1863 = vmatpush1.msra.mxu0 %v1818
        %1864 = vmatprep.subr.mxu0 %v1821
        %1865 = vmatpush1.msra.mxu0 %v1820
        %1866 = vmatprep.subr.mxu0 %v1823
        %1867 = vmatpush1.msra.mxu0 %v1822
        %1868 = vmatprep.subr.mxu0 %v1825
        %1869 = vmatpush1.msra.mxu0 %v1824
        %1870 = vmatprep.subr.mxu0 %v1827
        %1871 = vmatpush1.msra.mxu0 %v1826
        %1872 = vmatprep.subr.mxu0 %v1829
        %1873 = vmatpush1.msra.mxu0 %v1828
        %1874 = vmatprep.subr.mxu0 %v1831
        %1875 = vmatpush1.msra.mxu0 %v1830
        %1876 = vmatprep.subr.mxu0 %v1833
        %1877 = vmatpush1.msra.mxu0 %v1832
        %1878 = vmatprep.subr.mxu0 %v1835
        %1879 = vmatpush1.msra.mxu0 %v1834
        %1880 = vmatprep.subr.mxu0 %v1837
        %1881 = vmatpush1.msra.mxu0 %v1836
        %1882 = vmatprep.subr.mxu0 0.0
        %1883 = vmatpush1.msra.mxu0 0.0
        %1884 = vmatprep.subr.mxu0 0.0
        %1885 = vmatpush1.msra.mxu0 0.0
        %1886 = vmatprep.subr.mxu0 0.0
        %1887 = vmatpush1.msra.mxu0 0.0
        %1888 = vmatprep.subr.mxu0 0.0
        %1889 = vmatpush1.msra.mxu0 0.0
        %1890 = vmatprep.subr.mxu0 0.0
        %1891 = vmatpush1.msra.mxu0 0.0
        %1892 = vmatprep.subr.mxu0 0.0
        %1893 = vmatpush1.msra.mxu0 0.0
        %1894 = vmatprep.subr.mxu0 0.0
        %1895 = vmatpush1.msra.mxu0 0.0
        %1896 = vmatprep.subr.mxu0 0.0
        %1897 = vmatpush1.msra.mxu0 0.0
        %1898 = vmatprep.subr.mxu0 0.0
        %1899 = vmatpush1.msra.mxu0 0.0
        %1900 = vmatprep.subr.mxu0 0.0
        %1901 = vmatpush1.msra.mxu0 0.0
        %1902 = vmatprep.subr.mxu0 0.0
        %1903 = vmatpush1.msra.mxu0 0.0
        %1904 = vmatprep.subr.mxu0 0.0
        %1905 = vmatpush1.msra.mxu0 0.0
        %1906 = vmatprep.subr.mxu0 0.0
        %1907 = vmatpush1.msra.mxu0 0.0
        %1908 = vmatprep.subr.mxu0 0.0
        %1909 = vmatpush1.msra.mxu0 0.0
        %1910 = vmatprep.subr.mxu0 0.0
        %1911 = vmatpush1.msra.mxu0 0.0
        %1912 = vmatprep.subr.mxu0 0.0
        %1913 = vmatpush1.msra.mxu0 0.0
        %1914 = vmatprep.mubr.f32.mxu0 0.0
        %1915 = vmatmul.mubr.f32.gmra.mrb[0].mxu0 %v1805
        %v1916 = vpop.f32.mrb[0].mxu0
        %v1917 = vadd.f32 %v1843, %v1916
        %v1918 = vpop.f32.mrb[0].mxu0
        %v1919 = vadd.f32 %v1847, %v1918
        %1920 = vdwg.mxu0
        %v1921 = vmax.f32 %v1917, 0.0
        %v1922 = vmax.f32 %v1919, 0.0
        %v1923 = vld [vmem:[#allocation13] sm:$0xff]
        %v1924 = vld [vmem:[#allocation13 + $0x8] sm:$0xff]
        %v1925 = vld [vmem:[#allocation13 + $0x10] sm:$0xff]
        %v1926 = vld [vmem:[#allocation13 + $0x18] sm:$0xff]
        %v1927 = vld [vmem:[#allocation13 + $0x20] sm:$0xff]
        %v1928 = vld [vmem:[#allocation13 + $0x28] sm:$0xff]
        %v1929 = vld [vmem:[#allocation13 + $0x30] sm:$0xff]
        %v1930 = vld [vmem:[#allocation13 + $0x38] sm:$0xff]
        %v1931 = vld [vmem:[#allocation13 + $0x40] sm:$0xff]
        %v1932 = vld [vmem:[#allocation13 + $0x48] sm:$0xff]
        %v1933 = vld [vmem:[#allocation13 + $0x50] sm:$0xff]
        %v1934 = vld [vmem:[#allocation13 + $0x58] sm:$0xff]
        %v1935 = vld [vmem:[#allocation13 + $0x60] sm:$0xff]
        %v1936 = vld [vmem:[#allocation13 + $0x68] sm:$0xff]
        %v1937 = vld [vmem:[#allocation13 + $0x70] sm:$0xff]
        %v1938 = vld [vmem:[#allocation13 + $0x78] sm:$0xff]
        %v1939 = vld [vmem:[#allocation13 + $0x80] sm:$0xff]
        %v1940 = vld [vmem:[#allocation13 + $0x88] sm:$0xff]
        %v1941 = vld [vmem:[#allocation13 + $0x90] sm:$0xff]
        %v1942 = vld [vmem:[#allocation13 + $0x98] sm:$0xff]
        %v1943 = vld [vmem:[#allocation13 + $0xa0] sm:$0xff]
        %v1944 = vld [vmem:[#allocation13 + $0xa8] sm:$0xff]
        %v1945 = vld [vmem:[#allocation13 + $0xb0] sm:$0xff]
        %v1946 = vld [vmem:[#allocation13 + $0xb8] sm:$0xff]
        %v1947 = vld [vmem:[#allocation13 + $0xc0] sm:$0xff]
        %v1948 = vld [vmem:[#allocation13 + $0xc8] sm:$0xff]
        %v1949 = vld [vmem:[#allocation13 + $0xd0] sm:$0xff]
        %v1950 = vld [vmem:[#allocation13 + $0xd8] sm:$0xff]
        %v1951 = vld [vmem:[#allocation13 + $0xe0] sm:$0xff]
        %v1952 = vld [vmem:[#allocation13 + $0xe8] sm:$0xff]
        %v1953 = vld [vmem:[#allocation13 + $0xf0] sm:$0xff]
        %v1954 = vld [vmem:[#allocation13 + $0xf8] sm:$0xff]
        %v1955 = vld [vmem:[%s11] sm:$0x1]
        %v1957 = vlaneseq
        %v1958 = vshrl.u32 %v1957, 7
        %v1959 = vsub.s32 0, %v1958
        %v1960 = vrot.slane %v1955, %v1959
        %1962 = vmatprep.subr.mxu0 0.0
        %1963 = vmatpush1.msra.mxu0 %v1923
        %1964 = vmatprep.subr.mxu0 0.0
        %1965 = vmatpush1.msra.mxu0 %v1924
        %1966 = vmatprep.subr.mxu0 0.0
        %1967 = vmatpush1.msra.mxu0 %v1925
        %1968 = vmatprep.subr.mxu0 0.0
        %1969 = vmatpush1.msra.mxu0 %v1926
        %1970 = vmatprep.subr.mxu0 0.0
        %1971 = vmatpush1.msra.mxu0 %v1927
        %1972 = vmatprep.subr.mxu0 0.0
        %1973 = vmatpush1.msra.mxu0 %v1928
        %1974 = vmatprep.subr.mxu0 0.0
        %1975 = vmatpush1.msra.mxu0 %v1929
        %1976 = vmatprep.subr.mxu0 0.0
        %1977 = vmatpush1.msra.mxu0 %v1930
        %1978 = vmatprep.subr.mxu0 0.0
        %1979 = vmatpush1.msra.mxu0 %v1931
        %1980 = vmatprep.subr.mxu0 0.0
        %1981 = vmatpush1.msra.mxu0 %v1932
        %1982 = vmatprep.subr.mxu0 0.0
        %1983 = vmatpush1.msra.mxu0 %v1933
        %1984 = vmatprep.subr.mxu0 0.0
        %1985 = vmatpush1.msra.mxu0 %v1934
        %1986 = vmatprep.subr.mxu0 0.0
        %1987 = vmatpush1.msra.mxu0 %v1935
        %1988 = vmatprep.subr.mxu0 0.0
        %1989 = vmatpush1.msra.mxu0 %v1936
        %1990 = vmatprep.subr.mxu0 0.0
        %1991 = vmatpush1.msra.mxu0 %v1937
        %1992 = vmatprep.subr.mxu0 0.0
        %1993 = vmatpush1.msra.mxu0 %v1938
        %1994 = vmatprep.subr.mxu0 0.0
        %1995 = vmatpush1.msra.mxu0 %v1939
        %1996 = vmatprep.subr.mxu0 0.0
        %1997 = vmatpush1.msra.mxu0 %v1940
        %1998 = vmatprep.subr.mxu0 0.0
        %1999 = vmatpush1.msra.mxu0 %v1941
        %2000 = vmatprep.subr.mxu0 0.0
        %2001 = vmatpush1.msra.mxu0 %v1942
        %2002 = vmatprep.subr.mxu0 0.0
        %2003 = vmatpush1.msra.mxu0 %v1943
        %2004 = vmatprep.subr.mxu0 0.0
        %2005 = vmatpush1.msra.mxu0 %v1944
        %2006 = vmatprep.subr.mxu0 0.0
        %2007 = vmatpush1.msra.mxu0 %v1945
        %2008 = vmatprep.subr.mxu0 0.0
        %2009 = vmatpush1.msra.mxu0 %v1946
        %2010 = vmatprep.subr.mxu0 0.0
        %2011 = vmatpush1.msra.mxu0 %v1947
        %2012 = vmatprep.subr.mxu0 0.0
        %2013 = vmatpush1.msra.mxu0 %v1948
        %2014 = vmatprep.subr.mxu0 0.0
        %2015 = vmatpush1.msra.mxu0 %v1949
        %2016 = vmatprep.subr.mxu0 0.0
        %2017 = vmatpush1.msra.mxu0 %v1950
        %2018 = vmatprep.subr.mxu0 0.0
        %2019 = vmatpush1.msra.mxu0 %v1951
        %2020 = vmatprep.subr.mxu0 0.0
        %2021 = vmatpush1.msra.mxu0 %v1952
        %2022 = vmatprep.subr.mxu0 0.0
        %2023 = vmatpush1.msra.mxu0 %v1953
        %2024 = vmatprep.subr.mxu0 0.0
        %2025 = vmatpush1.msra.mxu0 %v1954
        %2026 = vmatprep.mubr.f32.mxu0 %v1922
        %2027 = vmatmul.mubr.f32.gmra.mrb[0].mxu0 %v1921
        %v2028 = vpop.f32.mrb[0].mxu0
        %v2029 = vadd.f32 %v1960, %v2028
        %v2030 = vpop.f32.mrb[0].mxu0
        %2031 = vdwg.mxu0
        %v2032 = vadd.f32 %v2029, %v1805
        %v2033 = vld [vmem:[%s12] sm:$0x1]
        %v2034 = vld [vmem:[%s13] sm:$0x1]
        %2035 = vadd.xlane.f32.xlu0 %v2032
        %v2036 = vpop.xlane.xlu0 %2035
        %v2037 = vmul.f32 %v2036, %v1782
        %v2038 = vsub.f32 %v2032, %v2037
        %v2039 = vmul.f32 %v2038, %v2038
        %2040 = vadd.xlane.f32.xlu0 %v2039
        %v2041 = vpop.xlane.xlu0 %2040
        %v2042 = vmul.f32 %v2041, %v1782
        %v2043 = vadd.f32 %v2042, 1e-06
        %v2044 = vrsqrt.pop %v2043
        %v2045 = vmul.f32 %v2038, %v2044
        %v2047 = vlaneseq
        %v2048 = vshrl.u32 %v2047, 7
        %v2049 = vsub.s32 0, %v2048
        %v2050 = vrot.slane %v2033, %v2049
        %v2052 = vmul.f32 %v2045, %v2050
        %v2054 = vlaneseq
        %v2055 = vshrl.u32 %v2054, 7
        %v2056 = vsub.s32 0, %v2055
        %v2057 = vrot.slane %v2034, %v2056
        %v2059 = vadd.f32 %v2052, %v2057
        %2060 = vst [vmem:[%s615] sm:$0xff] %v2059
        %s2061 = sand.u32 %s353, 1
        %s2062 = scalar_lea.sflag [#allocation4], %s2061
        %s2063 = sand.u32 %s353, 1
        %s2064 = smul.addr %s2063, 8
        %s2065 = scalar_lea.vmem [#allocation14], %s2064
        // Predicated region
        $region105: #{tpu_custom_call.1} parent=75 // pred_check
          %p2066 = pneg %p363
        $region106: #{tpu_custom_call.1} parent=75 // pred_check_branch
          %2068 = sbr.rel (%p2066) target = $region108
        $region107: #{tpu_custom_call.1} parent=75 // pred_region
          %s2070 = ssub.s32 128, 128
          %2071 = vsyncadd %s2062, %s2070
          %s2072 = smul.addr %s36, 128
          %s2073 = scalar_lea.hbm %s14, %s2072
          %s2075 = sshll.u32 %s2065, 4
          %s2076 = int_to_ptr.vmem [resolvable:$true] %s2075
          %2078 = dma.vmem_to_hbm [thread:$0]  %s2076, 128, %s2073, %s2062
        $region108: #{tpu_custom_call.1} parent=75 // pred_fallthru
          _
      $region76: #{tpu_custom_call.1} parent=5 // pred_fallthru
        _
      %p2079 = scmp.le.s32.totalorder 2, %s31
      // Predicated region
      $region109: #{tpu_custom_call.1} parent=5 // pred_check
        %p2080 = pneg %p2079
      $region110: #{tpu_custom_call.1} parent=5 // pred_check_branch
        %2082 = sbr.rel (%p2080) target = $region112
      $region111: #{tpu_custom_call.1} parent=5 // pred_region
        %s2083 = ssub.s32 %s31, 2
        // Predicated region
        $region113: #{tpu_custom_call.1} parent=111 // pred_check
          %p2084 = pneg %p369
        $region114: #{tpu_custom_call.1} parent=111 // pred_check_branch
          %2086 = sbr.rel (%p2084) target = $region116
        $region115: #{tpu_custom_call.1} parent=111 // pred_region
          %s2087 = sand.u32 %s354, 1
          %s2088 = scalar_lea.sflag [#allocation4], %s2087
          %s2089 = sand.u32 %s354, 1
          %s2090 = smul.addr %s2089, 8
          %s2091 = scalar_lea.vmem [#allocation14], %s2090
          %2092 = dma.done %s2088, 128
        $region116: #{tpu_custom_call.1} parent=111 // pred_fallthru
          _
      $region112: #{tpu_custom_call.1} parent=5 // pred_fallthru
        _
    $region6: #{tpu_custom_call.1} parent=1 // loop_footer
      %s35 = sadd.s32 1, %s31
    $region7: #{tpu_custom_call.1} parent=1 // loop_footer_branch
      %30 = sbr.rel target = $region3
    $region8: #{tpu_custom_call.1} parent=1 // loop_exit
      _
    %2093 = vsyncpa [#allocation3], 1
    %s2094 = scalar_lea.sflag [#allocation3], 1
    %2095 = vsyncpa %s2094, 1
    %2096 = vsyncpa [#allocation6], 1
    %s2097 = scalar_lea.sflag [#allocation6], 1
    %2098 = vsyncpa %s2097, 1
    %2099 = vsyncpa [#allocation9], 1
    %2100 = vsyncpa [#allocation12], 1
    %2101 = vsyncpa [#allocation4], 1
    %s2102 = scalar_lea.sflag [#allocation4], 1
    %2103 = vsyncpa %s2102, 1

</llo_original>
